<compile_context>
chip_gen: v5e
topology: v5e:2x2
jax: 0.10.0
libtpu: 0.0.40
codegen_flags: <defaults>
</compile_context>

<pallas_src>
import functools

import jax
import jax.numpy as jnp
from jax.experimental import pallas as pl
from jax.experimental.pallas import tpu as pltpu


# ----------------------------------------------------------------------------
# Tiling helper: biggest point-axis tile, preferring one that divides N.
# ----------------------------------------------------------------------------
def _choose_tn(n, target=1024):
    if n <= target:
        return n
    for cand in (target, 512, 256, 128):
        if n % cand == 0:
            return cand
    return target        # fall back to masking the last (partial) tile only


# ----------------------------------------------------------------------------
# Generic fused "1x1-conv stack (+BN+ReLU) + global max over points" kernel
# ----------------------------------------------------------------------------
def _stack_max_kernel(x_ref, *refs, stage_meta, n_valid, tn, need_mask):
    """Blocks: x (1, tn, Cin) f32; per stage (w, scale, bias); o (1, 1, Cout_last)
    f32 accumulator resident across the point ("arbitrary") grid axis.

    stage_meta: tuple of (batched, relu) per stage.  `batched` stages use a
    per-example (1, Cin, Cout) weight block (pre-folded input/feature transform)."""
    o_ref = refs[-1]
    n = pl.program_id(1)

    h = x_ref[0]                                       # (tn, Cin) f32
    for i, (batched, relu) in enumerate(stage_meta):
        w_ref, s_ref, b_ref = refs[3 * i: 3 * i + 3]
        w = w_ref[0] if batched else w_ref[...]
        h = jnp.dot(h.astype(w.dtype), w, preferred_element_type=jnp.float32)
        h = h * s_ref[...] + b_ref[...]
        if relu:
            h = jnp.maximum(h, 0.0)
    y = h                                              # (tn, Cout_last) f32

    if need_mask:
        # Only the last tile contains padded rows -> mask only there.
        last = pl.num_programs(1) - 1

        @pl.when(n == 0)
        def _():
            o_ref[0] = jnp.full((1, y.shape[-1]), -jnp.inf, jnp.float32)

        @pl.when(n != last)
        def _():
            o_ref[0] = jnp.maximum(o_ref[0], jnp.max(y, axis=0, keepdims=True))

        @pl.when(n == last)
        def _():
            rows = n * tn + jax.lax.broadcasted_iota(jnp.int32, (tn, 1), 0)
            ym = jnp.where(rows < n_valid, y, -jnp.inf)
            o_ref[0] = jnp.maximum(o_ref[0], jnp.max(ym, axis=0, keepdims=True))
    else:
        m = jnp.max(y, axis=0, keepdims=True)

        @pl.when(n == 0)
        def _():
            o_ref[0] = m

        @pl.when(n > 0)
        def _():
            o_ref[0] = jnp.maximum(o_ref[0], m)


def stack_max(x_bnc, stages, *, tn_target=1024):
    """(B, N, Cin) -> (B, Cout_last): fused 1x1-conv/BN/ReLU stack + max over N.

    stages: list of (w, scale, bias, relu) where w is (Cin, Cout) shared or
    (B, Cin, Cout) per-example (pre-folded transform)."""
    B, N, Cin = x_bnc.shape
    tn = _choose_tn(N, tn_target)
    n_tiles = pl.cdiv(N, tn)
    need_mask = (N % tn != 0)
    cout_last = stages[-1][0].shape[-1]
    stage_meta = tuple((w.ndim == 3, relu) for (w, _s, _b, relu) in stages)

    in_specs = [pl.BlockSpec((1, tn, Cin), lambda b, n: (b, n, 0))]
    args = [x_bnc]
    for (w, s, b, _relu) in stages:
        cout = w.shape[-1]
        if w.ndim == 3:
            in_specs.append(pl.BlockSpec((1,) + w.shape[1:], lambda b, n: (b, 0, 0)))
        else:
            in_specs.append(pl.BlockSpec(w.shape, lambda b, n: (0, 0)))
        in_specs.append(pl.BlockSpec((1, cout), lambda b, n: (0, 0)))
        in_specs.append(pl.BlockSpec((1, cout), lambda b, n: (0, 0)))
        args += [w, s.reshape(1, -1), b.reshape(1, -1)]

    kern = functools.partial(_stack_max_kernel, stage_meta=stage_meta,
                             n_valid=N, tn=tn, need_mask=need_mask)
    out = pl.pallas_call(
        kern,
        out_shape=jax.ShapeDtypeStruct((B, 1, cout_last), jnp.float32),
        grid_spec=pltpu.PrefetchScalarGridSpec(
            num_scalar_prefetch=0,
            grid=(B, n_tiles),
            in_specs=in_specs,
            out_specs=pl.BlockSpec((1, 1, cout_last), lambda b, n: (b, 0, 0)),
        ),
        compiler_params=pltpu.CompilerParams(
            dimension_semantics=("parallel", "arbitrary"),
            vmem_limit_bytes=64 * 1024 * 1024),
    )(*args)
    return out.reshape(B, cout_last)


# ----------------------------------------------------------------------------
# Fused fc1 -> fc2 -> fc3 head (bf16 weights, f32 accumulation)
# ----------------------------------------------------------------------------
def _mlp_head_kernel(x_ref, w1_ref, s1_ref, b1_ref, w2_ref, s2_ref, b2_ref,
                     w3_ref, s3_ref, b3_ref, o_ref):
    cdt = w1_ref.dtype
    h = jnp.dot(x_ref[...].astype(cdt), w1_ref[...],
                preferred_element_type=jnp.float32)
    h = jnp.maximum(h * s1_ref[...] + b1_ref[...], 0.0)
    h = jnp.dot(h.astype(cdt), w2_ref[...], preferred_element_type=jnp.float32)
    h = jnp.maximum(h * s2_ref[...] + b2_ref[...], 0.0)
    y = jnp.dot(h.astype(cdt), w3_ref[...], preferred_element_type=jnp.float32)
    o_ref[...] = (y * s3_ref[...] + b3_ref[...]).astype(o_ref.dtype)


def mlp_head(x, p1, p2, p3):
    """(B, 1024) -> (B, out_dim); B is tiny, everything in one VMEM block."""
    B = x.shape[0]
    out_dim = p3[0].shape[1]
    args = []
    for (w, s, b) in (p1, p2, p3):
        args += [w, s.reshape(1, -1), b.reshape(1, -1)]
    return pl.pallas_call(
        _mlp_head_kernel,
        out_shape=jax.ShapeDtypeStruct((B, out_dim), jnp.float32),
        in_specs=[pl.BlockSpec(memory_space=pltpu.MemorySpace.VMEM)] * 10,
        out_specs=pl.BlockSpec(memory_space=pltpu.MemorySpace.VMEM),
    )(x, *args)


# ----------------------------------------------------------------------------
# Deterministic synthetic parameters (Conv1d(k=1)/Linear weight + eval-mode BN fold)
# ----------------------------------------------------------------------------
def make_dense_params(key, cin, cout, bn=True, eps=1e-5, w_dtype=jnp.bfloat16):
    k1, k2, k3, k4, k5, k6 = jax.random.split(key, 6)
    w = (jax.random.normal(k1, (cin, cout), jnp.float32) * 0.05).astype(w_dtype)
    b = jax.random.normal(k2, (cout,), jnp.float32) * 0.05
    if bn:
        gamma = 1.0 + 0.1 * jax.random.normal(k3, (cout,), jnp.float32)
        beta = 0.1 * jax.random.normal(k4, (cout,), jnp.float32)
        rmean = 0.1 * jax.random.normal(k5, (cout,), jnp.float32)
        rvar = 1.0 + 0.1 * jax.random.uniform(k6, (cout,), jnp.float32)
        scale = gamma / jnp.sqrt(rvar + eps)
        bias = beta + (b - rmean) * scale
    else:
        scale = jnp.ones((cout,), jnp.float32)
        bias = b
    return w, scale, bias


def init_stn_params(key, k):
    keys = jax.random.split(key, 6)
    return {
        "conv1": make_dense_params(keys[0], k, 64, bn=True, w_dtype=jnp.bfloat16),
        "conv2": make_dense_params(keys[1], 64, 128, bn=True, w_dtype=jnp.bfloat16),
        "conv3": make_dense_params(keys[2], 128, 1024, bn=True, w_dtype=jnp.bfloat16),
        # HBM-bandwidth-bound head: keep weights in bf16
        "fc1": make_dense_params(keys[3], 1024, 512, bn=True, w_dtype=jnp.bfloat16),
        "fc2": make_dense_params(keys[4], 512, 256, bn=True, w_dtype=jnp.bfloat16),
        "fc3": make_dense_params(keys[5], 256, k * k, bn=False, w_dtype=jnp.bfloat16),
    }


def init_params(key, num_class=40):
    keys = jax.random.split(key, 8)
    feat = {
        "stn": init_stn_params(keys[0], 3),
        # conv1/conv2 kept f32: they are folded (per example) with trans / trans_feat
        # in f32 outside the kernels, then cast to bf16.
        "conv1": make_dense_params(keys[1], 3, 64, bn=True, w_dtype=jnp.float32),
        "fstn": init_stn_params(keys[2], 64),
        "conv2": make_dense_params(keys[3], 64, 128, bn=True, w_dtype=jnp.float32),
        "conv3": make_dense_params(keys[4], 128, 1024, bn=True, w_dtype=jnp.bfloat16),
    }
    return {
        "feat": feat,
        "fc1": make_dense_params(keys[5], 1024, 512, bn=True, w_dtype=jnp.bfloat16),
        "fc2": make_dense_params(keys[6], 512, 256, bn=True, w_dtype=jnp.bfloat16),
        "fc3": make_dense_params(keys[7], 256, num_class, bn=False, w_dtype=jnp.bfloat16),
    }


# ----------------------------------------------------------------------------
# Forward passes (thin JAX glue over the fused Pallas kernels)
# ----------------------------------------------------------------------------
def stnkd_forward(p, x_bnc, k, pre_stages=()):
    """STNkd.forward on channels-last input -> (B, k, k).  `pre_stages` lets the
    caller fuse preceding (folded) 1x1-conv stages in front of the STN stack."""
    B = x_bnc.shape[0]
    stages = list(pre_stages) + [
        (p["conv1"][0], p["conv1"][1], p["conv1"][2], True),
        (p["conv2"][0], p["conv2"][1], p["conv2"][2], True),
        (p["conv3"][0], p["conv3"][1], p["conv3"][2], True),
    ]
    g = stack_max(x_bnc, stages)                              # (B, 1024)
    t = mlp_head(g, p["fc1"], p["fc2"], p["fc3"])             # (B, k*k)
    t = t + jnp.eye(k, dtype=jnp.float32).reshape(1, k * k)
    return t.reshape(B, k, k)


def encoder_forward(p, x_bnc):
    """PointNetEncoder.forward, channels-last (B, N, 3) -> (B,1024), trans, trans_feat."""
    # input STN (k=3) directly on the raw point cloud
    trans = stnkd_forward(p["stn"], x_bnc, 3)                 # (B, 3, 3)

    # Fold the 3x3 input transform into conv1 per example: h1 = relu(bn1(x @ trans @ W1)).
    # h1 is recomputed per tile inside its consumers and never written to HBM.
    w1, s1, b1 = p["conv1"]
    tw1 = jnp.einsum("bij,jk->bik", trans, w1).astype(jnp.bfloat16)       # (B, 3, 64)
    stage1 = (tw1, s1, b1, True)

    # feature STN (k=64) with the encoder conv1 stage fused in front
    trans_feat = stnkd_forward(p["fstn"], x_bnc, 64, pre_stages=(stage1,))  # (B, 64, 64)

    # Fold the 64x64 feature transform into conv2 per example (tiny host-side einsum).
    w2, s2, b2 = p["conv2"]
    tw2 = jnp.einsum("bij,jk->bik", trans_feat, w2).astype(jnp.bfloat16)  # (B, 64, 128)
    w3, s3, b3 = p["conv3"]

    # Encoder tail: max_N( bn3(conv3( relu(bn2( (h1 @ trans_feat) @ W2 )) )) )
    g = stack_max(x_bnc, [stage1, (tw2, s2, b2, True), (w3, s3, b3, False)])
    return g, trans, trans_feat


def pointnet_cls_forward(params, x_bcn):
    """PointNet_CLS.forward. x_bcn: (B, 3, N) as in the PyTorch module."""
    x_bnc = jnp.transpose(x_bcn, (0, 2, 1)).astype(jnp.float32)
    g, _trans, trans_feat = encoder_forward(params["feat"], x_bnc)
    # Dropout(p=0.4) is the eval-mode identity; fc1/fc2/fc3 (+BN+ReLU) fused below.
    logits = mlp_head(g, params["fc1"], params["fc2"], params["fc3"])
    return logits, trans_feat


# ----------------------------------------------------------------------------
if __name__ == "__main__":
    key = jax.random.PRNGKey(0)
    kp, kx = jax.random.split(key)

    B, N, NUM_CLASS = 2, 128, 40
    params = init_params(kp, num_class=NUM_CLASS)
    x = jax.random.normal(kx, (B, 3, N), jnp.float32)     # (B, C=3, N) like PyTorch

    logits, trans_feat = pointnet_cls_forward(params, x)
    jax.block_until_ready((logits, trans_feat))

    assert logits.shape == (B, NUM_CLASS)
    assert trans_feat.shape == (B, 64, 64)
    assert bool(jnp.all(jnp.isfinite(logits)))
    print("KERNEL_OK")
</pallas_src>

<mosaic_0001>
module attributes {stable_mosaic.version = 11 : i64} {
  func.func @_stack_max_kernel(%arg0: i32, %arg1: i32, %arg2: memref<1x128x3xf32, #tpu.memory_space<vmem>>, %arg3: memref<3x64xbf16, #tpu.memory_space<vmem>>, %arg4: memref<1x64xf32, #tpu.memory_space<vmem>>, %arg5: memref<1x64xf32, #tpu.memory_space<vmem>>, %arg6: memref<64x128xbf16, #tpu.memory_space<vmem>>, %arg7: memref<1x128xf32, #tpu.memory_space<vmem>>, %arg8: memref<1x128xf32, #tpu.memory_space<vmem>>, %arg9: memref<128x1024xbf16, #tpu.memory_space<vmem>>, %arg10: memref<1x1024xf32, #tpu.memory_space<vmem>>, %arg11: memref<1x1024xf32, #tpu.memory_space<vmem>>, %arg12: memref<1x1x1024xf32, #tpu.memory_space<vmem>>) attributes {dimension_semantics = [#tpu.dimension_semantics<parallel>, #tpu.dimension_semantics<arbitrary>], iteration_bounds = array<i64: 2, 1>, scalar_prefetch = 0 : i64, scratch_operands = 0 : i64, tpu.core_type = #tpu.core_type<tc>, window_params = [{transform_indices = @transform_0, window_bounds = array<i64: 1, 128, 3>}, {pipeline_mode = #tpu.pipeline_mode<synchronous>, transform_indices = @transform_1, window_bounds = array<i64: 3, 64>}, {pipeline_mode = #tpu.pipeline_mode<synchronous>, transform_indices = @transform_2, window_bounds = array<i64: 1, 64>}, {pipeline_mode = #tpu.pipeline_mode<synchronous>, transform_indices = @transform_3, window_bounds = array<i64: 1, 64>}, {pipeline_mode = #tpu.pipeline_mode<synchronous>, transform_indices = @transform_4, window_bounds = array<i64: 64, 128>}, {pipeline_mode = #tpu.pipeline_mode<synchronous>, transform_indices = @transform_5, window_bounds = array<i64: 1, 128>}, {pipeline_mode = #tpu.pipeline_mode<synchronous>, transform_indices = @transform_6, window_bounds = array<i64: 1, 128>}, {pipeline_mode = #tpu.pipeline_mode<synchronous>, transform_indices = @transform_7, window_bounds = array<i64: 128, 1024>}, {pipeline_mode = #tpu.pipeline_mode<synchronous>, transform_indices = @transform_8, window_bounds = array<i64: 1, 1024>}, {pipeline_mode = #tpu.pipeline_mode<synchronous>, transform_indices = @transform_9, window_bounds = array<i64: 1, 1024>}, {transform_indices = @transform_10, window_bounds = array<i64: 1, 1, 1024>}]} {
    %c0 = arith.constant 0 : index
    %c0_0 = arith.constant 0 : index
    %c0_1 = arith.constant 0 : index
    %0 = vector.load %arg2[%c0, %c0_0, %c0_1] : memref<1x128x3xf32, #tpu.memory_space<vmem>>, vector<1x128x3xf32>
    %1 = vector.shape_cast %0 : vector<1x128x3xf32> to vector<128x3xf32>
    %c0_2 = arith.constant 0 : index
    %c0_3 = arith.constant 0 : index
    %2 = vector.load %arg3[%c0_2, %c0_3] : memref<3x64xbf16, #tpu.memory_space<vmem>>, vector<3x64xbf16>
    %3 = arith.truncf %1 : vector<128x3xf32> to vector<128x3xbf16>
    %cst = arith.constant dense<0.000000e+00> : vector<128x64xf32>
    %4 = tpu.matmul %3, %2, %cst {dimension_numbers = #tpu.dot_dimension_numbers<[1], [0], [0], [1], [0, 0, 1, 1], [], []>} : vector<128x3xbf16>, vector<3x64xbf16>, vector<128x64xf32> -> vector<128x64xf32>
    %c0_4 = arith.constant 0 : index
    %c0_5 = arith.constant 0 : index
    %5 = vector.load %arg4[%c0_4, %c0_5] : memref<1x64xf32, #tpu.memory_space<vmem>>, vector<1x64xf32>
    %6 = vector.broadcast %5 : vector<1x64xf32> to vector<128x64xf32>
    %7 = arith.mulf %4, %6 : vector<128x64xf32>
    %c0_6 = arith.constant 0 : index
    %c0_7 = arith.constant 0 : index
    %8 = vector.load %arg5[%c0_6, %c0_7] : memref<1x64xf32, #tpu.memory_space<vmem>>, vector<1x64xf32>
    %9 = vector.broadcast %8 : vector<1x64xf32> to vector<128x64xf32>
    %10 = arith.addf %7, %9 : vector<128x64xf32>
    %cst_8 = arith.constant 0.000000e+00 : f32
    %11 = vector.broadcast %cst_8 : f32 to vector<128x64xf32>
    %12 = arith.maximumf %10, %11 : vector<128x64xf32>
    %c0_9 = arith.constant 0 : index
    %c0_10 = arith.constant 0 : index
    %13 = vector.load %arg6[%c0_9, %c0_10] : memref<64x128xbf16, #tpu.memory_space<vmem>>, vector<64x128xbf16>
    %14 = arith.truncf %12 : vector<128x64xf32> to vector<128x64xbf16>
    %cst_11 = arith.constant dense<0.000000e+00> : vector<128x128xf32>
    %15 = tpu.matmul %14, %13, %cst_11 {dimension_numbers = #tpu.dot_dimension_numbers<[1], [0], [0], [1], [0, 0, 1, 1], [], []>} : vector<128x64xbf16>, vector<64x128xbf16>, vector<128x128xf32> -> vector<128x128xf32>
    %c0_12 = arith.constant 0 : index
    %c0_13 = arith.constant 0 : index
    %16 = vector.load %arg7[%c0_12, %c0_13] : memref<1x128xf32, #tpu.memory_space<vmem>>, vector<1x128xf32>
    %17 = vector.broadcast %16 : vector<1x128xf32> to vector<128x128xf32>
    %18 = arith.mulf %15, %17 : vector<128x128xf32>
    %c0_14 = arith.constant 0 : index
    %c0_15 = arith.constant 0 : index
    %19 = vector.load %arg8[%c0_14, %c0_15] : memref<1x128xf32, #tpu.memory_space<vmem>>, vector<1x128xf32>
    %20 = vector.broadcast %19 : vector<1x128xf32> to vector<128x128xf32>
    %21 = arith.addf %18, %20 : vector<128x128xf32>
    %cst_16 = arith.constant 0.000000e+00 : f32
    %22 = vector.broadcast %cst_16 : f32 to vector<128x128xf32>
    %23 = arith.maximumf %21, %22 : vector<128x128xf32>
    %c0_17 = arith.constant 0 : index
    %c0_18 = arith.constant 0 : index
    %24 = vector.load %arg9[%c0_17, %c0_18] : memref<128x1024xbf16, #tpu.memory_space<vmem>>, vector<128x1024xbf16>
    %25 = arith.truncf %23 : vector<128x128xf32> to vector<128x128xbf16>
    %cst_19 = arith.constant dense<0.000000e+00> : vector<128x1024xf32>
    %26 = tpu.matmul %25, %24, %cst_19 {dimension_numbers = #tpu.dot_dimension_numbers<[1], [0], [0], [1], [0, 0, 1, 1], [], []>} : vector<128x128xbf16>, vector<128x1024xbf16>, vector<128x1024xf32> -> vector<128x1024xf32>
    %c0_20 = arith.constant 0 : index
    %c0_21 = arith.constant 0 : index
    %27 = vector.load %arg10[%c0_20, %c0_21] : memref<1x1024xf32, #tpu.memory_space<vmem>>, vector<1x1024xf32>
    %28 = vector.broadcast %27 : vector<1x1024xf32> to vector<128x1024xf32>
    %29 = arith.mulf %26, %28 : vector<128x1024xf32>
    %c0_22 = arith.constant 0 : index
    %c0_23 = arith.constant 0 : index
    %30 = vector.load %arg11[%c0_22, %c0_23] : memref<1x1024xf32, #tpu.memory_space<vmem>>, vector<1x1024xf32>
    %31 = vector.broadcast %30 : vector<1x1024xf32> to vector<128x1024xf32>
    %32 = arith.addf %29, %31 : vector<128x1024xf32>
    %cst_24 = arith.constant 0.000000e+00 : f32
    %33 = vector.broadcast %cst_24 : f32 to vector<128x1024xf32>
    %34 = arith.maximumf %32, %33 : vector<128x1024xf32>
    %cst_25 = arith.constant dense<0xFF800000> : vector<1024xf32>
    %35 = vector.multi_reduction <maximumf>, %34, %cst_25 [0] : vector<128x1024xf32> to vector<1024xf32>
    %36 = vector.shape_cast %35 : vector<1024xf32> to vector<1x1024xf32>
    %c0_i32 = arith.constant 0 : i32
    %37 = arith.cmpi eq, %arg1, %c0_i32 : i32
    %38 = arith.extui %37 : i1 to i32
    %c0_i32_26 = arith.constant 0 : i32
    %39 = arith.cmpi ne, %38, %c0_i32_26 : i32
    scf.if %39 {
      %c0_29 = arith.constant 0 : index
      %c0_30 = arith.constant 0 : index
      %c0_31 = arith.constant 0 : index
      %43 = vector.load %arg12[%c0_29, %c0_30, %c0_31] : memref<1x1x1024xf32, #tpu.memory_space<vmem>>, vector<1x1x1024xf32>
      %44 = vector.shape_cast %43 : vector<1x1x1024xf32> to vector<1x1024xf32>
      %45 = vector.shape_cast %36 : vector<1x1024xf32> to vector<1x1x1024xf32>
      tpu.vector_store %arg12[%c0_29, %c0_30, %c0_31], %45 {strides = array<i32>} : memref<1x1x1024xf32, #tpu.memory_space<vmem>>, vector<1x1x1024xf32>,
    } else {
    }
    %c0_i32_27 = arith.constant 0 : i32
    %40 = arith.cmpi sgt, %arg1, %c0_i32_27 : i32
    %41 = arith.extui %40 : i1 to i32
    %c0_i32_28 = arith.constant 0 : i32
    %42 = arith.cmpi ne, %41, %c0_i32_28 : i32
    scf.if %42 {
      %c0_29 = arith.constant 0 : index
      %c0_30 = arith.constant 0 : index
      %c0_31 = arith.constant 0 : index
      %43 = vector.load %arg12[%c0_29, %c0_30, %c0_31] : memref<1x1x1024xf32, #tpu.memory_space<vmem>>, vector<1x1x1024xf32>
      %44 = vector.shape_cast %43 : vector<1x1x1024xf32> to vector<1x1024xf32>
      %45 = arith.maximumf %44, %36 : vector<1x1024xf32>
      %c0_32 = arith.constant 0 : index
      %c0_33 = arith.constant 0 : index
      %c0_34 = arith.constant 0 : index
      %46 = vector.load %arg12[%c0_32, %c0_33, %c0_34] : memref<1x1x1024xf32, #tpu.memory_space<vmem>>, vector<1x1x1024xf32>
      %47 = vector.shape_cast %46 : vector<1x1x1024xf32> to vector<1x1024xf32>
      %48 = vector.shape_cast %45 : vector<1x1024xf32> to vector<1x1x1024xf32>
      tpu.vector_store %arg12[%c0_32, %c0_33, %c0_34], %48 {strides = array<i32>} : memref<1x1x1024xf32, #tpu.memory_space<vmem>>, vector<1x1x1024xf32>,
    } else {
    }
    return
  }
  func.func @transform_0(%arg0: i32, %arg1: i32) -> (i32, i32, i32) {
    %c0_i32 = arith.constant 0 : i32
    %c0_i32_0 = arith.constant 0 : i32
    return %arg0, %arg1, %c0_i32 : i32, i32, i32
  }
  func.func @transform_1(%arg0: i32, %arg1: i32) -> (i32, i32) {
    %c0_i32 = arith.constant 0 : i32
    %c0_i32_0 = arith.constant 0 : i32
    %c0_i32_1 = arith.constant 0 : i32
    return %c0_i32, %c0_i32_0 : i32, i32
  }
  func.func @transform_2(%arg0: i32, %arg1: i32) -> (i32, i32) {
    %c0_i32 = arith.constant 0 : i32
    %c0_i32_0 = arith.constant 0 : i32
    %c0_i32_1 = arith.constant 0 : i32
    return %c0_i32, %c0_i32_0 : i32, i32
  }
  func.func @transform_3(%arg0: i32, %arg1: i32) -> (i32, i32) {
    %c0_i32 = arith.constant 0 : i32
    %c0_i32_0 = arith.constant 0 : i32
    %c0_i32_1 = arith.constant 0 : i32
    return %c0_i32, %c0_i32_0 : i32, i32
  }
  func.func @transform_4(%arg0: i32, %arg1: i32) -> (i32, i32) {
    %c0_i32 = arith.constant 0 : i32
    %c0_i32_0 = arith.constant 0 : i32
    %c0_i32_1 = arith.constant 0 : i32
    return %c0_i32, %c0_i32_0 : i32, i32
  }
  func.func @transform_5(%arg0: i32, %arg1: i32) -> (i32, i32) {
    %c0_i32 = arith.constant 0 : i32
    %c0_i32_0 = arith.constant 0 : i32
    %c0_i32_1 = arith.constant 0 : i32
    return %c0_i32, %c0_i32_0 : i32, i32
  }
  func.func @transform_6(%arg0: i32, %arg1: i32) -> (i32, i32) {
    %c0_i32 = arith.constant 0 : i32
    %c0_i32_0 = arith.constant 0 : i32
    %c0_i32_1 = arith.constant 0 : i32
    return %c0_i32, %c0_i32_0 : i32, i32
  }
  func.func @transform_7(%arg0: i32, %arg1: i32) -> (i32, i32) {
    %c0_i32 = arith.constant 0 : i32
    %c0_i32_0 = arith.constant 0 : i32
    %c0_i32_1 = arith.constant 0 : i32
    return %c0_i32, %c0_i32_0 : i32, i32
  }
  func.func @transform_8(%arg0: i32, %arg1: i32) -> (i32, i32) {
    %c0_i32 = arith.constant 0 : i32
    %c0_i32_0 = arith.constant 0 : i32
    %c0_i32_1 = arith.constant 0 : i32
    return %c0_i32, %c0_i32_0 : i32, i32
  }
  func.func @transform_9(%arg0: i32, %arg1: i32) -> (i32, i32) {
    %c0_i32 = arith.constant 0 : i32
    %c0_i32_0 = arith.constant 0 : i32
    %c0_i32_1 = arith.constant 0 : i32
    return %c0_i32, %c0_i32_0 : i32, i32
  }
  func.func @transform_10(%arg0: i32, %arg1: i32) -> (i32, i32, i32) {
    %c0_i32 = arith.constant 0 : i32
    %c0_i32_0 = arith.constant 0 : i32
    %c0_i32_1 = arith.constant 0 : i32
    return %arg0, %c0_i32, %c0_i32_0 : i32, i32, i32
  }
}

</mosaic_0001>

<llo_original>
// kernel: tpu_custom_call.1
$region0: #{tpu_custom_call.1}
  #allocation0 [shape = 'u32[]', space=smem, size = 0x4, offset = 0x4, fixed_abs, tag = 'smem constant byte address 0x4 - core index']
  #allocation1 [shape = 'u32[72,128]{1,0:T(1,128)}', space=vmem, size = 0x9000, scoped, tag = 'internal scratch']
  %s0 = inlined_call_operand.vmem [shape: f32[2,128,3], index: 0, kind: input, shape index: {}]
  %s1 = inlined_call_operand.vmem [shape: bf16[3,64], index: 1, kind: input, shape index: {}]
  %s2 = inlined_call_operand.vmem [shape: f32[1,64], index: 2, kind: input, shape index: {}]
  %s3 = inlined_call_operand.vmem [shape: f32[1,64], index: 3, kind: input, shape index: {}]
  %s4 = inlined_call_operand.vmem [shape: bf16[64,128], index: 4, kind: input, shape index: {}]
  %s5 = inlined_call_operand.vmem [shape: f32[1,128], index: 5, kind: input, shape index: {}]
  %s6 = inlined_call_operand.vmem [shape: f32[1,128], index: 6, kind: input, shape index: {}]
  %s7 = inlined_call_operand.hbm [shape: bf16[128,1024], index: 7, kind: input, shape index: {}]
  %s8 = inlined_call_operand.vmem [shape: f32[1,1024], index: 8, kind: input, shape index: {}]
  %s9 = inlined_call_operand.vmem [shape: f32[1,1024], index: 9, kind: input, shape index: {}]
  %s10 = inlined_call_operand.hbm [shape: f32[2,1,1024], index: 10, kind: output, shape index: {}]
  %s11 = sld [smem:[#allocation0]]
  $region85: #{tpu_custom_call.1} parent=0
    _
  %s13 = ssub.s32 1, %s11
  %s14 = scalar_select 0, %s13, %s11
  $region1: #{tpu_custom_call.1} parent=0
    #allocation2 [shape = 'u8[262144]{0}', space=vmem, size = 0x40000, scoped, tag = 'input window, operand 7, single buffered']
    #allocation3 [shape = 's32[2]{0}', space=sflag, size = 0x8, scoped, tag = 'scoped memory for tpu_custom_call.1']
    #allocation4 [shape = 's32[2]{0}', space=sflag, size = 0x8, scoped, tag = 'scoped memory for tpu_custom_call.1']
    #allocation5 [shape = 'u8[8192]{0}', space=vmem, size = 0x2000, scoped, tag = 'output window, operand 0']
    %15 = vsyncpa [#allocation3], 0
    %16 = vsyncpa [#allocation4], 0
    %s17 = scalar_lea.sflag [#allocation4], 1
    %18 = vsyncpa %s17, 0
    loop: start=0, step=1, limit=4
    $region2: #{tpu_custom_call.1} parent=1 // loop_pre_header
      _
    $region3: #{tpu_custom_call.1} parent=1 // loop_header
      %s20 = sphi 0, %s24
      %p21 = scmp.ge.s32.totalorder %s20, 4
      %s27 = sphi 0, %s39
      %s28 = sphi 0, %s35
      %s29 = sphi 0, %s27
      %s30 = sphi 0, %s28
      %s31 = sphi 0, %s29
      %s32 = sphi 0, %s30
      %s44 = sphi 0, %s46
      %s47 = sphi 0, %s44
      %s48 = sphi 0, %s47
      %s64 = sphi 0, %s48
      %s68 = sphi 0, %s68
      %s70 = sphi 0, %s68
      %s71 = sphi 0, %s70
      %s85 = sphi 0, %s71
      %s89 = sphi 0, %s89
      %s91 = sphi 0, %s89
      %s92 = sphi 0, %s91
      %s106 = sphi 0, %s92
      %s110 = sphi 0, %s110
      %s112 = sphi 0, %s110
      %s113 = sphi 0, %s112
      %s127 = sphi 0, %s113
      %s131 = sphi 0, %s131
      %s133 = sphi 0, %s131
      %s134 = sphi 0, %s133
      %s148 = sphi 0, %s134
      %s152 = sphi 0, %s152
      %s154 = sphi 0, %s152
      %s155 = sphi 0, %s154
      %s169 = sphi 0, %s155
      %s173 = sphi 0, %s173
      %s175 = sphi 0, %s173
      %s176 = sphi 0, %s175
      %s190 = sphi 0, %s176
      %s194 = sphi 0, %s194
      %s196 = sphi 0, %s194
      %s197 = sphi 0, %s196
      %s211 = sphi 0, %s197
      %s215 = sphi 0, %s215
      %s217 = sphi 0, %s215
      %s218 = sphi 0, %s217
      %s232 = sphi 0, %s218
      %s236 = sphi 0, %s236
      %s238 = sphi 0, %s236
      %s239 = sphi 0, %s238
      %s253 = sphi 0, %s239
      %s259 = sphi 0, %s261
      %s262 = sphi 0, %s259
      %s263 = sphi 0, %s262
      %s279 = sphi 0, %s263
    $region4: #{tpu_custom_call.1} parent=1 // loop_header_branch
      %23 = sbr.rel (%p21) target = $region8
    $region5: #{tpu_custom_call.1} parent=1 // loop_body
      %s25 = ssub.s32 %s20, 1
      %s26 = ssub.s32 %s20, 2
      %s33 = sadd.s32 1, %s28
      %p34 = scmp.ge.s32.totalorder %s33, 1
      %s35 = scalar_select %p34, 0, %s33
      %s36 = sadd.s32 1, %s27
      %s37 = scalar_select %p34, %s36, %s27
      %p38 = scmp.ge.s32.totalorder %s37, 2
      %s39 = scalar_select %p38, 0, %s37
      %s40 = ssub.s32 %s27, %s39
      %s41 = ssub.s32 %s28, %s35
      %s42 = sor.u32 %s40, %s41
      %p43 = scmp.eq.s32.totalorder %s42, 0
      %s45 = sadd.s32 %s44, 1
      %s46 = scalar_select %p43, %s44, %s45
      %p49 = pneg %p43
      %p50 = scmp.eq.s32.totalorder %s20, 1
      %p51 = por %p49, %p50
      %p52 = scmp.ne.s32.totalorder %s44, %s47
      %p53 = scmp.eq.s32.totalorder %s20, 0
      %p54 = por %p52, %p53
      %p55 = scmp.ne.s32.totalorder %s44, %s47
      %p56 = scmp.eq.s32.totalorder %s25, 1
      %p57 = por %p55, %p56
      %p58 = scmp.ne.s32.totalorder %s47, %s48
      %p59 = scmp.eq.s32.totalorder %s25, 0
      %p60 = por %p58, %p59
      %p61 = scmp.ne.s32.totalorder %s47, %s48
      %p62 = scmp.eq.s32.totalorder %s26, 1
      %p63 = por %p61, %p62
      %p65 = scmp.ne.s32.totalorder %s48, %s64
      %p66 = scmp.eq.s32.totalorder %s26, 0
      %p67 = por %p65, %p66
      %s69 = sadd.s32 %s68, 1
      %p72 = scmp.eq.s32.totalorder %s20, 1
      %p73 = scmp.ne.s32.totalorder %s68, %s70
      %p74 = scmp.eq.s32.totalorder %s20, 0
      %p75 = por %p73, %p74
      %p76 = scmp.ne.s32.totalorder %s68, %s70
      %p77 = scmp.eq.s32.totalorder %s25, 1
      %p78 = por %p76, %p77
      %p79 = scmp.ne.s32.totalorder %s70, %s71
      %p80 = scmp.eq.s32.totalorder %s25, 0
      %p81 = por %p79, %p80
      %p82 = scmp.ne.s32.totalorder %s70, %s71
      %p83 = scmp.eq.s32.totalorder %s26, 1
      %p84 = por %p82, %p83
      %p86 = scmp.ne.s32.totalorder %s71, %s85
      %p87 = scmp.eq.s32.totalorder %s26, 0
      %p88 = por %p86, %p87
      %s90 = sadd.s32 %s89, 1
      %p93 = scmp.eq.s32.totalorder %s20, 1
      %p94 = scmp.ne.s32.totalorder %s89, %s91
      %p95 = scmp.eq.s32.totalorder %s20, 0
      %p96 = por %p94, %p95
      %p97 = scmp.ne.s32.totalorder %s89, %s91
      %p98 = scmp.eq.s32.totalorder %s25, 1
      %p99 = por %p97, %p98
      %p100 = scmp.ne.s32.totalorder %s91, %s92
      %p101 = scmp.eq.s32.totalorder %s25, 0
      %p102 = por %p100, %p101
      %p103 = scmp.ne.s32.totalorder %s91, %s92
      %p104 = scmp.eq.s32.totalorder %s26, 1
      %p105 = por %p103, %p104
      %p107 = scmp.ne.s32.totalorder %s92, %s106
      %p108 = scmp.eq.s32.totalorder %s26, 0
      %p109 = por %p107, %p108
      %s111 = sadd.s32 %s110, 1
      %p114 = scmp.eq.s32.totalorder %s20, 1
      %p115 = scmp.ne.s32.totalorder %s110, %s112
      %p116 = scmp.eq.s32.totalorder %s20, 0
      %p117 = por %p115, %p116
      %p118 = scmp.ne.s32.totalorder %s110, %s112
      %p119 = scmp.eq.s32.totalorder %s25, 1
      %p120 = por %p118, %p119
      %p121 = scmp.ne.s32.totalorder %s112, %s113
      %p122 = scmp.eq.s32.totalorder %s25, 0
      %p123 = por %p121, %p122
      %p124 = scmp.ne.s32.totalorder %s112, %s113
      %p125 = scmp.eq.s32.totalorder %s26, 1
      %p126 = por %p124, %p125
      %p128 = scmp.ne.s32.totalorder %s113, %s127
      %p129 = scmp.eq.s32.totalorder %s26, 0
      %p130 = por %p128, %p129
      %s132 = sadd.s32 %s131, 1
      %p135 = scmp.eq.s32.totalorder %s20, 1
      %p136 = scmp.ne.s32.totalorder %s131, %s133
      %p137 = scmp.eq.s32.totalorder %s20, 0
      %p138 = por %p136, %p137
      %p139 = scmp.ne.s32.totalorder %s131, %s133
      %p140 = scmp.eq.s32.totalorder %s25, 1
      %p141 = por %p139, %p140
      %p142 = scmp.ne.s32.totalorder %s133, %s134
      %p143 = scmp.eq.s32.totalorder %s25, 0
      %p144 = por %p142, %p143
      %p145 = scmp.ne.s32.totalorder %s133, %s134
      %p146 = scmp.eq.s32.totalorder %s26, 1
      %p147 = por %p145, %p146
      %p149 = scmp.ne.s32.totalorder %s134, %s148
      %p150 = scmp.eq.s32.totalorder %s26, 0
      %p151 = por %p149, %p150
      %s153 = sadd.s32 %s152, 1
      %p156 = scmp.eq.s32.totalorder %s20, 1
      %p157 = scmp.ne.s32.totalorder %s152, %s154
      %p158 = scmp.eq.s32.totalorder %s20, 0
      %p159 = por %p157, %p158
      %p160 = scmp.ne.s32.totalorder %s152, %s154
      %p161 = scmp.eq.s32.totalorder %s25, 1
      %p162 = por %p160, %p161
      %p163 = scmp.ne.s32.totalorder %s154, %s155
      %p164 = scmp.eq.s32.totalorder %s25, 0
      %p165 = por %p163, %p164
      %p166 = scmp.ne.s32.totalorder %s154, %s155
      %p167 = scmp.eq.s32.totalorder %s26, 1
      %p168 = por %p166, %p167
      %p170 = scmp.ne.s32.totalorder %s155, %s169
      %p171 = scmp.eq.s32.totalorder %s26, 0
      %p172 = por %p170, %p171
      %s174 = sadd.s32 %s173, 1
      %p177 = scmp.eq.s32.totalorder %s20, 1
      %p178 = scmp.ne.s32.totalorder %s173, %s175
      %p179 = scmp.eq.s32.totalorder %s20, 0
      %p180 = por %p178, %p179
      %p181 = scmp.ne.s32.totalorder %s173, %s175
      %p182 = scmp.eq.s32.totalorder %s25, 1
      %p183 = por %p181, %p182
      %p184 = scmp.ne.s32.totalorder %s175, %s176
      %p185 = scmp.eq.s32.totalorder %s25, 0
      %p186 = por %p184, %p185
      %p187 = scmp.ne.s32.totalorder %s175, %s176
      %p188 = scmp.eq.s32.totalorder %s26, 1
      %p189 = por %p187, %p188
      %p191 = scmp.ne.s32.totalorder %s176, %s190
      %p192 = scmp.eq.s32.totalorder %s26, 0
      %p193 = por %p191, %p192
      %s195 = sadd.s32 %s194, 1
      %p198 = scmp.eq.s32.totalorder %s20, 1
      %p199 = scmp.ne.s32.totalorder %s194, %s196
      %p200 = scmp.eq.s32.totalorder %s20, 0
      %p201 = por %p199, %p200
      %p202 = scmp.ne.s32.totalorder %s194, %s196
      %p203 = scmp.eq.s32.totalorder %s25, 1
      %p204 = por %p202, %p203
      %p205 = scmp.ne.s32.totalorder %s196, %s197
      %p206 = scmp.eq.s32.totalorder %s25, 0
      %p207 = por %p205, %p206
      %p208 = scmp.ne.s32.totalorder %s196, %s197
      %p209 = scmp.eq.s32.totalorder %s26, 1
      %p210 = por %p208, %p209
      %p212 = scmp.ne.s32.totalorder %s197, %s211
      %p213 = scmp.eq.s32.totalorder %s26, 0
      %p214 = por %p212, %p213
      %s216 = sadd.s32 %s215, 1
      %p219 = scmp.eq.s32.totalorder %s20, 1
      %p220 = scmp.ne.s32.totalorder %s215, %s217
      %p221 = scmp.eq.s32.totalorder %s20, 0
      %p222 = por %p220, %p221
      %p223 = scmp.ne.s32.totalorder %s215, %s217
      %p224 = scmp.eq.s32.totalorder %s25, 1
      %p225 = por %p223, %p224
      %p226 = scmp.ne.s32.totalorder %s217, %s218
      %p227 = scmp.eq.s32.totalorder %s25, 0
      %p228 = por %p226, %p227
      %p229 = scmp.ne.s32.totalorder %s217, %s218
      %p230 = scmp.eq.s32.totalorder %s26, 1
      %p231 = por %p229, %p230
      %p233 = scmp.ne.s32.totalorder %s218, %s232
      %p234 = scmp.eq.s32.totalorder %s26, 0
      %p235 = por %p233, %p234
      %s237 = sadd.s32 %s236, 1
      %p240 = scmp.eq.s32.totalorder %s20, 1
      %p241 = scmp.ne.s32.totalorder %s236, %s238
      %p242 = scmp.eq.s32.totalorder %s20, 0
      %p243 = por %p241, %p242
      %p244 = scmp.ne.s32.totalorder %s236, %s238
      %p245 = scmp.eq.s32.totalorder %s25, 1
      %p246 = por %p244, %p245
      %p247 = scmp.ne.s32.totalorder %s238, %s239
      %p248 = scmp.eq.s32.totalorder %s25, 0
      %p249 = por %p247, %p248
      %p250 = scmp.ne.s32.totalorder %s238, %s239
      %p251 = scmp.eq.s32.totalorder %s26, 1
      %p252 = por %p250, %p251
      %p254 = scmp.ne.s32.totalorder %s239, %s253
      %p255 = scmp.eq.s32.totalorder %s26, 0
      %p256 = por %p254, %p255
      %s257 = ssub.s32 %s27, %s39
      %p258 = scmp.eq.s32.totalorder %s257, 0
      %s260 = sadd.s32 %s259, 1
      %s261 = scalar_select %p258, %s259, %s260
      %p264 = pneg %p258
      %p265 = scmp.eq.s32.totalorder %s20, 1
      %p266 = por %p264, %p265
      %p267 = scmp.ne.s32.totalorder %s259, %s262
      %p268 = scmp.eq.s32.totalorder %s20, 0
      %p269 = por %p267, %p268
      %p270 = scmp.ne.s32.totalorder %s259, %s262
      %p271 = scmp.eq.s32.totalorder %s25, 1
      %p272 = por %p270, %p271
      %p273 = scmp.ne.s32.totalorder %s262, %s263
      %p274 = scmp.eq.s32.totalorder %s25, 0
      %p275 = por %p273, %p274
      %p276 = scmp.ne.s32.totalorder %s262, %s263
      %p277 = scmp.eq.s32.totalorder %s26, 1
      %p278 = por %p276, %p277
      %p280 = scmp.ne.s32.totalorder %s263, %s279
      %p281 = scmp.eq.s32.totalorder %s26, 0
      %p282 = por %p280, %p281
      %p283 = scmp.le.s32.totalorder 1, %s20
      %p284 = scmp.lt.s32.totalorder %s20, 3
      %p285 = pnand %p283, %p284
      %p286 = pneg %p285
      // Predicated region
      $region9: #{tpu_custom_call.1} parent=5 // pred_check
        _
      $region10: #{tpu_custom_call.1} parent=5 // pred_check_branch
        %288 = sbr.rel (%p285) target = $region12
      $region11: #{tpu_custom_call.1} parent=5 // pred_region
        %s289 = ssub.s32 %s20, 1
        // Predicated region
        $region13: #{tpu_custom_call.1} parent=11 // pred_check
          %p290 = pneg %p81
        $region14: #{tpu_custom_call.1} parent=11 // pred_check_branch
          %292 = sbr.rel (%p290) target = $region16
        $region15: #{tpu_custom_call.1} parent=11 // pred_region
          _
        $region16: #{tpu_custom_call.1} parent=11 // pred_fallthru
          _
        // Predicated region
        $region17: #{tpu_custom_call.1} parent=11 // pred_check
          %p293 = pneg %p102
        $region18: #{tpu_custom_call.1} parent=11 // pred_check_branch
          %295 = sbr.rel (%p293) target = $region20
        $region19: #{tpu_custom_call.1} parent=11 // pred_region
          _
        $region20: #{tpu_custom_call.1} parent=11 // pred_fallthru
          _
        // Predicated region
        $region21: #{tpu_custom_call.1} parent=11 // pred_check
          %p296 = pneg %p123
        $region22: #{tpu_custom_call.1} parent=11 // pred_check_branch
          %298 = sbr.rel (%p296) target = $region24
        $region23: #{tpu_custom_call.1} parent=11 // pred_region
          _
        $region24: #{tpu_custom_call.1} parent=11 // pred_fallthru
          _
        // Predicated region
        $region25: #{tpu_custom_call.1} parent=11 // pred_check
          %p299 = pneg %p144
        $region26: #{tpu_custom_call.1} parent=11 // pred_check_branch
          %301 = sbr.rel (%p299) target = $region28
        $region27: #{tpu_custom_call.1} parent=11 // pred_region
          _
        $region28: #{tpu_custom_call.1} parent=11 // pred_fallthru
          _
        // Predicated region
        $region29: #{tpu_custom_call.1} parent=11 // pred_check
          %p302 = pneg %p165
        $region30: #{tpu_custom_call.1} parent=11 // pred_check_branch
          %304 = sbr.rel (%p302) target = $region32
        $region31: #{tpu_custom_call.1} parent=11 // pred_region
          _
        $region32: #{tpu_custom_call.1} parent=11 // pred_fallthru
          _
        // Predicated region
        $region33: #{tpu_custom_call.1} parent=11 // pred_check
          %p305 = pneg %p186
        $region34: #{tpu_custom_call.1} parent=11 // pred_check_branch
          %307 = sbr.rel (%p305) target = $region36
        $region35: #{tpu_custom_call.1} parent=11 // pred_region
          _
        $region36: #{tpu_custom_call.1} parent=11 // pred_fallthru
          _
        // Predicated region
        $region37: #{tpu_custom_call.1} parent=11 // pred_check
          %p308 = pneg %p207
        $region38: #{tpu_custom_call.1} parent=11 // pred_check_branch
          %310 = sbr.rel (%p308) target = $region40
        $region39: #{tpu_custom_call.1} parent=11 // pred_region
          %312 = vsyncadd [#allocation3], 0
          %s313 = sshll.u32 %s7, 4
          %s314 = int_to_ptr.hbm [resolvable:$true] %s313
          %s315 = sshll.u32 [#allocation2], 4
          %s316 = int_to_ptr.vmem [resolvable:$true] %s315
          %321 = dma.hbm_to_vmem [thread:$0]  %s314, 8192, %s316, [#allocation3], 512, 512, 32
        $region40: #{tpu_custom_call.1} parent=11 // pred_fallthru
          _
        // Predicated region
        $region41: #{tpu_custom_call.1} parent=11 // pred_check
          %p322 = pneg %p228
        $region42: #{tpu_custom_call.1} parent=11 // pred_check_branch
          %324 = sbr.rel (%p322) target = $region44
        $region43: #{tpu_custom_call.1} parent=11 // pred_region
          _
        $region44: #{tpu_custom_call.1} parent=11 // pred_fallthru
          _
        // Predicated region
        $region45: #{tpu_custom_call.1} parent=11 // pred_check
          %p325 = pneg %p249
        $region46: #{tpu_custom_call.1} parent=11 // pred_check_branch
          %327 = sbr.rel (%p325) target = $region48
        $region47: #{tpu_custom_call.1} parent=11 // pred_region
          _
        $region48: #{tpu_custom_call.1} parent=11 // pred_fallthru
          _
      $region12: #{tpu_custom_call.1} parent=5 // pred_fallthru
        _
      %p328 = scmp.lt.s32.totalorder %s20, 2
      // Predicated region
      $region49: #{tpu_custom_call.1} parent=5 // pred_check
        %p329 = pneg %p328
      $region50: #{tpu_custom_call.1} parent=5 // pred_check_branch
        %331 = sbr.rel (%p329) target = $region52
      $region51: #{tpu_custom_call.1} parent=5 // pred_region
        // Predicated region
        $region53: #{tpu_custom_call.1} parent=51 // pred_check
          %p332 = pneg %p54
        $region54: #{tpu_custom_call.1} parent=51 // pred_check_branch
          %334 = sbr.rel (%p332) target = $region56
        $region55: #{tpu_custom_call.1} parent=51 // pred_region
          %s335 = smul.u32 16, %s28
          %p336 = scmp.lt.s32.totalorder %s27, 1
          %s337 = scalar_select %p336, %s27, 1
          %p338 = scmp.lt.s32.totalorder %s335, 15
          %s339 = scalar_select %p338, %s335, 15
          %s340 = smul.addr %s337, 16
          %s341 = sadd.s32 %s339, %s340
          %s342 = smul.addr %s341, 8
          %s343 = scalar_lea.vmem %s0, %s342
          %s344 = smul.u32 16, %s28
        $region56: #{tpu_custom_call.1} parent=51 // pred_fallthru
          _
      $region52: #{tpu_custom_call.1} parent=5 // pred_fallthru
        _
      %p345 = scmp.le.s32.totalorder 1, %s20
      %p346 = scmp.lt.s32.totalorder %s20, 3
      %p347 = pnand %p345, %p346
      %p348 = pneg %p347
      // Predicated region
      $region57: #{tpu_custom_call.1} parent=5 // pred_check
        _
      $region58: #{tpu_custom_call.1} parent=5 // pred_check_branch
        %350 = sbr.rel (%p347) target = $region60
      $region59: #{tpu_custom_call.1} parent=5 // pred_region
        %s351 = ssub.s32 %s20, 1
        // Predicated region
        $region61: #{tpu_custom_call.1} parent=59 // pred_check
          %p352 = pneg %p207
        $region62: #{tpu_custom_call.1} parent=59 // pred_check_branch
          %354 = sbr.rel (%p352) target = $region64
        $region63: #{tpu_custom_call.1} parent=59 // pred_region
          %356 = dma.done [#allocation3], 8192
        $region64: #{tpu_custom_call.1} parent=59 // pred_fallthru
          _
        %s357 = smul.u32 16, %s30
        %p358 = scmp.lt.s32.totalorder %s29, 1
        %s359 = scalar_select %p358, %s29, 1
        %p360 = scmp.lt.s32.totalorder %s357, 15
        %s361 = scalar_select %p360, %s357, 15
        %s362 = smul.addr %s359, 16
        %s363 = sadd.s32 %s361, %s362
        %s364 = smul.addr %s363, 8
        %s365 = scalar_lea.vmem %s0, %s364
        %p366 = pneg %p60
        %p367 = pneg %p57
        %p368 = pneg %p81
        %p369 = pneg %p78
        %p370 = pneg %p102
        %p371 = pneg %p99
        %p372 = pneg %p123
        %p373 = pneg %p120
        %p374 = pneg %p144
        %p375 = pneg %p141
        %p376 = pneg %p165
        %p377 = pneg %p162
        %p378 = pneg %p186
        %p379 = pneg %p183
        %p380 = pneg %p207
        %p381 = pneg %p204
        %p382 = pneg %p228
        %p383 = pneg %p225
        %p384 = pneg %p249
        %p385 = pneg %p246
        %p386 = pneg %p275
        %p387 = pneg %p272
        %s388 = sand.u32 %s262, 1
        %s389 = scalar_lea.sflag [#allocation4], %s388
        %s390 = sand.u32 %s262, 1
        %s391 = smul.addr %s390, 8
        %s392 = scalar_lea.vmem [#allocation5], %s391
        %s393 = smul.u32 16, %s30
        %p394 = scmp.lt.s32.totalorder %s29, 1
        %s395 = scalar_select %p394, %s29, 1
        %p396 = scmp.lt.s32.totalorder %s393, 15
        %s397 = scalar_select %p396, %s393, 15
        %s398 = smul.addr %s395, 16
        %s399 = sadd.s32 %s397, %s398
        %s400 = smul.addr %s399, 8
        %s401 = scalar_lea.vmem %s0, %s400
        %s402 = smul.u32 16, %s30
        %v404 = vld [vmem:[%s401] sm:$0xff]
        %v405 = vld [vmem:[%s401 + $0x8] sm:$0xff]
        %v406 = vld [vmem:[%s401 + $0x10] sm:$0xff]
        %v407 = vld [vmem:[%s401 + $0x18] sm:$0xff]
        %v408 = vld [vmem:[%s401 + $0x20] sm:$0xff]
        %v409 = vld [vmem:[%s401 + $0x28] sm:$0xff]
        %v410 = vld [vmem:[%s401 + $0x30] sm:$0xff]
        %v411 = vld [vmem:[%s401 + $0x38] sm:$0xff]
        %v412 = vld [vmem:[%s401 + $0x40] sm:$0xff]
        %v413 = vld [vmem:[%s401 + $0x48] sm:$0xff]
        %v414 = vld [vmem:[%s401 + $0x50] sm:$0xff]
        %v415 = vld [vmem:[%s401 + $0x58] sm:$0xff]
        %v416 = vld [vmem:[%s401 + $0x60] sm:$0xff]
        %v417 = vld [vmem:[%s401 + $0x68] sm:$0xff]
        %v418 = vld [vmem:[%s401 + $0x70] sm:$0xff]
        %v419 = vld [vmem:[%s401 + $0x78] sm:$0xff]
        %v420 = vld [vmem:[%s1] sm:$0x3]
        %v421 = vpack.c.bf16 %v405, %v404
        %v422 = vpack.c.bf16 %v407, %v406
        %v423 = vpack.c.bf16 %v409, %v408
        %v424 = vpack.c.bf16 %v411, %v410
        %v425 = vpack.c.bf16 %v413, %v412
        %v426 = vpack.c.bf16 %v415, %v414
        %v427 = vpack.c.bf16 %v417, %v416
        %v428 = vpack.c.bf16 %v419, %v418
        %vm429 = vcmask 23552
        %v431 = vsel %vm429, %v421, 0
        %v434 = vsel %vm429, %v422, 0
        %v437 = vsel %vm429, %v423, 0
        %v440 = vsel %vm429, %v424, 0
        %v443 = vsel %vm429, %v425, 0
        %v446 = vsel %vm429, %v426, 0
        %v449 = vsel %vm429, %v427, 0
        %v452 = vsel %vm429, %v428, 0
        %vm454 = vcmask 1040384
        %vm455 = vcmask 1041408
        %v456 = vsel %vm454, 4294967295, 65535
        %v457 = vsel %vm455, %v456, 0
        %v459 = vand.u32 %v420, %v457
        %461 = vmatpush.bf16.msra.mxu0 0
        %462 = vmatpush.bf16.msra.mxu0 0
        %463 = vmatpush.bf16.msra.mxu0 0
        %464 = vmatpush.bf16.msra.mxu0 0
        %465 = vmatpush.bf16.msra.mxu0 0
        %466 = vmatpush.bf16.msra.mxu0 0
        %467 = vmatpush.bf16.msra.mxu0 0
        %468 = vmatpush.bf16.msra.mxu0 %v459
        %469 = vmatmul.bf16.gmra.mxu0 %v431
        %v470 = vpop.f32.mrf.mxu0
        %v471 = vadd.f32 0.0, %v470
        %v472 = vpop.f32.mrf.mxu0
        %v473 = vadd.f32 0.0, %v472
        %474 = vmatmul.bf16.gmra.mxu0 %v434
        %v475 = vpop.f32.mrf.mxu0
        %v476 = vadd.f32 0.0, %v475
        %v477 = vpop.f32.mrf.mxu0
        %v478 = vadd.f32 0.0, %v477
        %479 = vmatmul.bf16.gmra.mxu0 %v437
        %v480 = vpop.f32.mrf.mxu0
        %v481 = vadd.f32 0.0, %v480
        %v482 = vpop.f32.mrf.mxu0
        %v483 = vadd.f32 0.0, %v482
        %484 = vmatmul.bf16.gmra.mxu0 %v440
        %v485 = vpop.f32.mrf.mxu0
        %v486 = vadd.f32 0.0, %v485
        %v487 = vpop.f32.mrf.mxu0
        %v488 = vadd.f32 0.0, %v487
        %489 = vmatmul.bf16.gmra.mxu0 %v443
        %v490 = vpop.f32.mrf.mxu0
        %v491 = vadd.f32 0.0, %v490
        %v492 = vpop.f32.mrf.mxu0
        %v493 = vadd.f32 0.0, %v492
        %494 = vmatmul.bf16.gmra.mxu0 %v446
        %v495 = vpop.f32.mrf.mxu0
        %v496 = vadd.f32 0.0, %v495
        %v497 = vpop.f32.mrf.mxu0
        %v498 = vadd.f32 0.0, %v497
        %499 = vmatmul.bf16.gmra.mxu0 %v449
        %v500 = vpop.f32.mrf.mxu0
        %v501 = vadd.f32 0.0, %v500
        %v502 = vpop.f32.mrf.mxu0
        %v503 = vadd.f32 0.0, %v502
        %504 = vmatmul.bf16.gmra.mxu0 %v452
        %v505 = vpop.f32.mrf.mxu0
        %v506 = vadd.f32 0.0, %v505
        %v507 = vpop.f32.mrf.mxu0
        %v508 = vadd.f32 0.0, %v507
        %509 = vdwg.mxu0
        %v510 = vld [vmem:[%s2] sm:$0x1]
        %v512 = vperm.slane %v510, 0
        %v514 = vmul.f32 %v471, %v512
        %v515 = vmul.f32 %v473, %v512
        %v516 = vmul.f32 %v476, %v512
        %v517 = vmul.f32 %v478, %v512
        %v518 = vmul.f32 %v481, %v512
        %v519 = vmul.f32 %v483, %v512
        %v520 = vmul.f32 %v486, %v512
        %v521 = vmul.f32 %v488, %v512
        %v522 = vmul.f32 %v491, %v512
        %v523 = vmul.f32 %v493, %v512
        %v524 = vmul.f32 %v496, %v512
        %v525 = vmul.f32 %v498, %v512
        %v526 = vmul.f32 %v501, %v512
        %v527 = vmul.f32 %v503, %v512
        %v528 = vmul.f32 %v506, %v512
        %v529 = vmul.f32 %v508, %v512
        %v530 = vld [vmem:[%s3] sm:$0x1]
        %v532 = vperm.slane %v530, 0
        %v534 = vadd.f32 %v514, %v532
        %v535 = vadd.f32 %v515, %v532
        %v536 = vadd.f32 %v516, %v532
        %v537 = vadd.f32 %v517, %v532
        %v538 = vadd.f32 %v518, %v532
        %v539 = vadd.f32 %v519, %v532
        %v540 = vadd.f32 %v520, %v532
        %v541 = vadd.f32 %v521, %v532
        %v542 = vadd.f32 %v522, %v532
        %v543 = vadd.f32 %v523, %v532
        %v544 = vadd.f32 %v524, %v532
        %v545 = vadd.f32 %v525, %v532
        %v546 = vadd.f32 %v526, %v532
        %v547 = vadd.f32 %v527, %v532
        %v548 = vadd.f32 %v528, %v532
        %v549 = vadd.f32 %v529, %v532
        %v550 = vmax.f32 %v534, 0.0
        %v551 = vmax.f32 %v535, 0.0
        %v552 = vmax.f32 %v536, 0.0
        %v553 = vmax.f32 %v537, 0.0
        %v554 = vmax.f32 %v538, 0.0
        %v555 = vmax.f32 %v539, 0.0
        %v556 = vmax.f32 %v540, 0.0
        %v557 = vmax.f32 %v541, 0.0
        %v558 = vmax.f32 %v542, 0.0
        %v559 = vmax.f32 %v543, 0.0
        %v560 = vmax.f32 %v544, 0.0
        %v561 = vmax.f32 %v545, 0.0
        %v562 = vmax.f32 %v546, 0.0
        %v563 = vmax.f32 %v547, 0.0
        %v564 = vmax.f32 %v548, 0.0
        %v565 = vmax.f32 %v549, 0.0
        %v566 = vld [vmem:[%s4] sm:$0xf]
        %v567 = vld [vmem:[%s4 + $0x4] sm:$0xf]
        %v568 = vld [vmem:[%s4 + $0x8] sm:$0xf]
        %v569 = vld [vmem:[%s4 + $0xc] sm:$0xf]
        %v570 = vld [vmem:[%s4 + $0x10] sm:$0xf]
        %v571 = vld [vmem:[%s4 + $0x14] sm:$0xf]
        %v572 = vld [vmem:[%s4 + $0x18] sm:$0xf]
        %v573 = vld [vmem:[%s4 + $0x1c] sm:$0xf]
        %v574 = vpack.c.bf16 %v551, %v550
        %v575 = vpack.c.bf16 %v553, %v552
        %v576 = vpack.c.bf16 %v555, %v554
        %v577 = vpack.c.bf16 %v557, %v556
        %v578 = vpack.c.bf16 %v559, %v558
        %v579 = vpack.c.bf16 %v561, %v560
        %v580 = vpack.c.bf16 %v563, %v562
        %v581 = vpack.c.bf16 %v565, %v564
        %v590 = vunpack.c.l.b16 %v566
        %v591 = vunpack.c.l.b16 %v567
        %v592 = vunpack.c.l.b16 %v568
        %v593 = vunpack.c.l.b16 %v569
        %v594 = vunpack.c.l.b16 %v570
        %v595 = vunpack.c.l.b16 %v571
        %v596 = vunpack.c.l.b16 %v572
        %v597 = vunpack.c.l.b16 %v573
        %v598 = vpack.c.b16 %v591, %v590
        %v599 = vpack.c.b16 %v593, %v592
        %v600 = vpack.c.b16 %v595, %v594
        %v601 = vpack.c.b16 %v597, %v596
        %vm606 = vcmask 523264
        %v608 = vsel %vm606, %v574, 0
        %v611 = vsel %vm606, %v575, 0
        %v614 = vsel %vm606, %v576, 0
        %v617 = vsel %vm606, %v577, 0
        %v620 = vsel %vm606, %v578, 0
        %v623 = vsel %vm606, %v579, 0
        %v626 = vsel %vm606, %v580, 0
        %v629 = vsel %vm606, %v581, 0
        %631 = vmatpush.bf16.msra.mxu0 0
        %632 = vmatpush.bf16.msra.mxu0 0
        %633 = vmatpush.bf16.msra.mxu0 0
        %634 = vmatpush.bf16.msra.mxu0 0
        %635 = vmatpush.bf16.msra.mxu0 %v601
        %636 = vmatpush.bf16.msra.mxu0 %v600
        %637 = vmatpush.bf16.msra.mxu0 %v599
        %638 = vmatpush.bf16.msra.mxu0 %v598
        %639 = vmatmul.bf16.gmra.mxu0 %v608
        %v640 = vpop.f32.mrf.mxu0
        %v641 = vadd.f32 0.0, %v640
        %v642 = vpop.f32.mrf.mxu0
        %v643 = vadd.f32 0.0, %v642
        %644 = vmatmul.bf16.gmra.mxu0 %v611
        %v645 = vpop.f32.mrf.mxu0
        %v646 = vadd.f32 0.0, %v645
        %v647 = vpop.f32.mrf.mxu0
        %v648 = vadd.f32 0.0, %v647
        %649 = vmatmul.bf16.gmra.mxu0 %v614
        %v650 = vpop.f32.mrf.mxu0
        %v651 = vadd.f32 0.0, %v650
        %v652 = vpop.f32.mrf.mxu0
        %v653 = vadd.f32 0.0, %v652
        %654 = vmatmul.bf16.gmra.mxu0 %v617
        %v655 = vpop.f32.mrf.mxu0
        %v656 = vadd.f32 0.0, %v655
        %v657 = vpop.f32.mrf.mxu0
        %v658 = vadd.f32 0.0, %v657
        %659 = vmatmul.bf16.gmra.mxu0 %v620
        %v660 = vpop.f32.mrf.mxu0
        %v661 = vadd.f32 0.0, %v660
        %v662 = vpop.f32.mrf.mxu0
        %v663 = vadd.f32 0.0, %v662
        %664 = vmatmul.bf16.gmra.mxu0 %v623
        %v665 = vpop.f32.mrf.mxu0
        %v666 = vadd.f32 0.0, %v665
        %v667 = vpop.f32.mrf.mxu0
        %v668 = vadd.f32 0.0, %v667
        %669 = vmatmul.bf16.gmra.mxu0 %v626
        %v670 = vpop.f32.mrf.mxu0
        %v671 = vadd.f32 0.0, %v670
        %v672 = vpop.f32.mrf.mxu0
        %v673 = vadd.f32 0.0, %v672
        %674 = vmatmul.bf16.gmra.mxu0 %v629
        %v675 = vpop.f32.mrf.mxu0
        %v676 = vadd.f32 0.0, %v675
        %v677 = vpop.f32.mrf.mxu0
        %v678 = vadd.f32 0.0, %v677
        %679 = vdwg.mxu0
        %v680 = vld [vmem:[%s5] sm:$0x1]
        %v682 = vperm.slane %v680, 0
        %v684 = vmul.f32 %v641, %v682
        %v685 = vmul.f32 %v643, %v682
        %v686 = vmul.f32 %v646, %v682
        %v687 = vmul.f32 %v648, %v682
        %v688 = vmul.f32 %v651, %v682
        %v689 = vmul.f32 %v653, %v682
        %v690 = vmul.f32 %v656, %v682
        %v691 = vmul.f32 %v658, %v682
        %v692 = vmul.f32 %v661, %v682
        %v693 = vmul.f32 %v663, %v682
        %v694 = vmul.f32 %v666, %v682
        %v695 = vmul.f32 %v668, %v682
        %v696 = vmul.f32 %v671, %v682
        %v697 = vmul.f32 %v673, %v682
        %v698 = vmul.f32 %v676, %v682
        %v699 = vmul.f32 %v678, %v682
        %v700 = vld [vmem:[%s6] sm:$0x1]
        %v702 = vperm.slane %v700, 0
        %v704 = vadd.f32 %v684, %v702
        %v705 = vadd.f32 %v685, %v702
        %v706 = vadd.f32 %v686, %v702
        %v707 = vadd.f32 %v687, %v702
        %v708 = vadd.f32 %v688, %v702
        %v709 = vadd.f32 %v689, %v702
        %v710 = vadd.f32 %v690, %v702
        %v711 = vadd.f32 %v691, %v702
        %v712 = vadd.f32 %v692, %v702
        %v713 = vadd.f32 %v693, %v702
        %v714 = vadd.f32 %v694, %v702
        %v715 = vadd.f32 %v695, %v702
        %v716 = vadd.f32 %v696, %v702
        %v717 = vadd.f32 %v697, %v702
        %v718 = vadd.f32 %v698, %v702
        %v719 = vadd.f32 %v699, %v702
        %v720 = vmax.f32 %v704, 0.0
        %v721 = vmax.f32 %v705, 0.0
        %v722 = vmax.f32 %v706, 0.0
        %v723 = vmax.f32 %v707, 0.0
        %v724 = vmax.f32 %v708, 0.0
        %v725 = vmax.f32 %v709, 0.0
        %v726 = vmax.f32 %v710, 0.0
        %v727 = vmax.f32 %v711, 0.0
        %v728 = vmax.f32 %v712, 0.0
        %v729 = vmax.f32 %v713, 0.0
        %v730 = vmax.f32 %v714, 0.0
        %v731 = vmax.f32 %v715, 0.0
        %v732 = vmax.f32 %v716, 0.0
        %v733 = vmax.f32 %v717, 0.0
        %v734 = vmax.f32 %v718, 0.0
        %v735 = vmax.f32 %v719, 0.0
        %v736 = vld [vmem:[#allocation2] sm:$0xff]
        %v737 = vld [vmem:[#allocation2 + $0x8] sm:$0xff]
        %v738 = vld [vmem:[#allocation2 + $0x10] sm:$0xff]
        %v739 = vld [vmem:[#allocation2 + $0x18] sm:$0xff]
        %v740 = vld [vmem:[#allocation2 + $0x20] sm:$0xff]
        %v741 = vld [vmem:[#allocation2 + $0x28] sm:$0xff]
        %v742 = vld [vmem:[#allocation2 + $0x30] sm:$0xff]
        %v743 = vld [vmem:[#allocation2 + $0x38] sm:$0xff]
        %v744 = vld [vmem:[#allocation2 + $0x40] sm:$0xff]
        %v745 = vld [vmem:[#allocation2 + $0x48] sm:$0xff]
        %v746 = vld [vmem:[#allocation2 + $0x50] sm:$0xff]
        %v747 = vld [vmem:[#allocation2 + $0x58] sm:$0xff]
        %v748 = vld [vmem:[#allocation2 + $0x60] sm:$0xff]
        %v749 = vld [vmem:[#allocation2 + $0x68] sm:$0xff]
        %v750 = vld [vmem:[#allocation2 + $0x70] sm:$0xff]
        %v751 = vld [vmem:[#allocation2 + $0x78] sm:$0xff]
        %v752 = vld [vmem:[#allocation2 + $0x80] sm:$0xff]
        %v753 = vld [vmem:[#allocation2 + $0x88] sm:$0xff]
        %v754 = vld [vmem:[#allocation2 + $0x90] sm:$0xff]
        %v755 = vld [vmem:[#allocation2 + $0x98] sm:$0xff]
        %v756 = vld [vmem:[#allocation2 + $0xa0] sm:$0xff]
        %v757 = vld [vmem:[#allocation2 + $0xa8] sm:$0xff]
        %v758 = vld [vmem:[#allocation2 + $0xb0] sm:$0xff]
        %v759 = vld [vmem:[#allocation2 + $0xb8] sm:$0xff]
        %v760 = vld [vmem:[#allocation2 + $0xc0] sm:$0xff]
        %v761 = vld [vmem:[#allocation2 + $0xc8] sm:$0xff]
        %v762 = vld [vmem:[#allocation2 + $0xd0] sm:$0xff]
        %v763 = vld [vmem:[#allocation2 + $0xd8] sm:$0xff]
        %v764 = vld [vmem:[#allocation2 + $0xe0] sm:$0xff]
        %v765 = vld [vmem:[#allocation2 + $0xe8] sm:$0xff]
        %v766 = vld [vmem:[#allocation2 + $0xf0] sm:$0xff]
        %v767 = vld [vmem:[#allocation2 + $0xf8] sm:$0xff]
        %v768 = vld [vmem:[#allocation2 + $0x100] sm:$0xff]
        %v769 = vld [vmem:[#allocation2 + $0x108] sm:$0xff]
        %v770 = vld [vmem:[#allocation2 + $0x110] sm:$0xff]
        %v771 = vld [vmem:[#allocation2 + $0x118] sm:$0xff]
        %v772 = vld [vmem:[#allocation2 + $0x120] sm:$0xff]
        %v773 = vld [vmem:[#allocation2 + $0x128] sm:$0xff]
        %v774 = vld [vmem:[#allocation2 + $0x130] sm:$0xff]
        %v775 = vld [vmem:[#allocation2 + $0x138] sm:$0xff]
        %v776 = vld [vmem:[#allocation2 + $0x140] sm:$0xff]
        %v777 = vld [vmem:[#allocation2 + $0x148] sm:$0xff]
        %v778 = vld [vmem:[#allocation2 + $0x150] sm:$0xff]
        %v779 = vld [vmem:[#allocation2 + $0x158] sm:$0xff]
        %v780 = vld [vmem:[#allocation2 + $0x160] sm:$0xff]
        %v781 = vld [vmem:[#allocation2 + $0x168] sm:$0xff]
        %v782 = vld [vmem:[#allocation2 + $0x170] sm:$0xff]
        %v783 = vld [vmem:[#allocation2 + $0x178] sm:$0xff]
        %v784 = vld [vmem:[#allocation2 + $0x180] sm:$0xff]
        %v785 = vld [vmem:[#allocation2 + $0x188] sm:$0xff]
        %v786 = vld [vmem:[#allocation2 + $0x190] sm:$0xff]
        %v787 = vld [vmem:[#allocation2 + $0x198] sm:$0xff]
        %v788 = vld [vmem:[#allocation2 + $0x1a0] sm:$0xff]
        %v789 = vld [vmem:[#allocation2 + $0x1a8] sm:$0xff]
        %v790 = vld [vmem:[#allocation2 + $0x1b0] sm:$0xff]
        %v791 = vld [vmem:[#allocation2 + $0x1b8] sm:$0xff]
        %v792 = vld [vmem:[#allocation2 + $0x1c0] sm:$0xff]
        %v793 = vld [vmem:[#allocation2 + $0x1c8] sm:$0xff]
        %v794 = vld [vmem:[#allocation2 + $0x1d0] sm:$0xff]
        %v795 = vld [vmem:[#allocation2 + $0x1d8] sm:$0xff]
        %v796 = vld [vmem:[#allocation2 + $0x1e0] sm:$0xff]
        %v797 = vld [vmem:[#allocation2 + $0x1e8] sm:$0xff]
        %v798 = vld [vmem:[#allocation2 + $0x1f0] sm:$0xff]
        %v799 = vld [vmem:[#allocation2 + $0x1f8] sm:$0xff]
        %v800 = vpack.c.bf16 %v721, %v720
        %v801 = vpack.c.bf16 %v723, %v722
        %v802 = vpack.c.bf16 %v725, %v724
        %v803 = vpack.c.bf16 %v727, %v726
        %v804 = vpack.c.bf16 %v729, %v728
        %v805 = vpack.c.bf16 %v731, %v730
        %v806 = vpack.c.bf16 %v733, %v732
        %v807 = vpack.c.bf16 %v735, %v734
        %v872 = vunpack.c.l.b16 %v736
        %v873 = vunpack.c.h.b16 %v736
        %v874 = vunpack.c.l.b16 %v737
        %v875 = vunpack.c.h.b16 %v737
        %v876 = vunpack.c.l.b16 %v738
        %v877 = vunpack.c.h.b16 %v738
        %v878 = vunpack.c.l.b16 %v739
        %v879 = vunpack.c.h.b16 %v739
        %v880 = vunpack.c.l.b16 %v740
        %v881 = vunpack.c.h.b16 %v740
        %v882 = vunpack.c.l.b16 %v741
        %v883 = vunpack.c.h.b16 %v741
        %v884 = vunpack.c.l.b16 %v742
        %v885 = vunpack.c.h.b16 %v742
        %v886 = vunpack.c.l.b16 %v743
        %v887 = vunpack.c.h.b16 %v743
        %v888 = vunpack.c.l.b16 %v744
        %v889 = vunpack.c.h.b16 %v744
        %v890 = vunpack.c.l.b16 %v745
        %v891 = vunpack.c.h.b16 %v745
        %v892 = vunpack.c.l.b16 %v746
        %v893 = vunpack.c.h.b16 %v746
        %v894 = vunpack.c.l.b16 %v747
        %v895 = vunpack.c.h.b16 %v747
        %v896 = vunpack.c.l.b16 %v748
        %v897 = vunpack.c.h.b16 %v748
        %v898 = vunpack.c.l.b16 %v749
        %v899 = vunpack.c.h.b16 %v749
        %v900 = vunpack.c.l.b16 %v750
        %v901 = vunpack.c.h.b16 %v750
        %v902 = vunpack.c.l.b16 %v751
        %v903 = vunpack.c.h.b16 %v751
        %v904 = vunpack.c.l.b16 %v752
        %v905 = vunpack.c.h.b16 %v752
        %v906 = vunpack.c.l.b16 %v753
        %v907 = vunpack.c.h.b16 %v753
        %v908 = vunpack.c.l.b16 %v754
        %v909 = vunpack.c.h.b16 %v754
        %v910 = vunpack.c.l.b16 %v755
        %v911 = vunpack.c.h.b16 %v755
        %v912 = vunpack.c.l.b16 %v756
        %v913 = vunpack.c.h.b16 %v756
        %v914 = vunpack.c.l.b16 %v757
        %v915 = vunpack.c.h.b16 %v757
        %v916 = vunpack.c.l.b16 %v758
        %v917 = vunpack.c.h.b16 %v758
        %v918 = vunpack.c.l.b16 %v759
        %v919 = vunpack.c.h.b16 %v759
        %v920 = vunpack.c.l.b16 %v760
        %v921 = vunpack.c.h.b16 %v760
        %v922 = vunpack.c.l.b16 %v761
        %v923 = vunpack.c.h.b16 %v761
        %v924 = vunpack.c.l.b16 %v762
        %v925 = vunpack.c.h.b16 %v762
        %v926 = vunpack.c.l.b16 %v763
        %v927 = vunpack.c.h.b16 %v763
        %v928 = vunpack.c.l.b16 %v764
        %v929 = vunpack.c.h.b16 %v764
        %v930 = vunpack.c.l.b16 %v765
        %v931 = vunpack.c.h.b16 %v765
        %v932 = vunpack.c.l.b16 %v766
        %v933 = vunpack.c.h.b16 %v766
        %v934 = vunpack.c.l.b16 %v767
        %v935 = vunpack.c.h.b16 %v767
        %v936 = vunpack.c.l.b16 %v768
        %v937 = vunpack.c.h.b16 %v768
        %v938 = vunpack.c.l.b16 %v769
        %v939 = vunpack.c.h.b16 %v769
        %v940 = vunpack.c.l.b16 %v770
        %v941 = vunpack.c.h.b16 %v770
        %v942 = vunpack.c.l.b16 %v771
        %v943 = vunpack.c.h.b16 %v771
        %v944 = vunpack.c.l.b16 %v772
        %v945 = vunpack.c.h.b16 %v772
        %v946 = vunpack.c.l.b16 %v773
        %v947 = vunpack.c.h.b16 %v773
        %v948 = vunpack.c.l.b16 %v774
        %v949 = vunpack.c.h.b16 %v774
        %v950 = vunpack.c.l.b16 %v775
        %v951 = vunpack.c.h.b16 %v775
        %v952 = vunpack.c.l.b16 %v776
        %v953 = vunpack.c.h.b16 %v776
        %v954 = vunpack.c.l.b16 %v777
        %v955 = vunpack.c.h.b16 %v777
        %v956 = vunpack.c.l.b16 %v778
        %v957 = vunpack.c.h.b16 %v778
        %v958 = vunpack.c.l.b16 %v779
        %v959 = vunpack.c.h.b16 %v779
        %v960 = vunpack.c.l.b16 %v780
        %v961 = vunpack.c.h.b16 %v780
        %v962 = vunpack.c.l.b16 %v781
        %v963 = vunpack.c.h.b16 %v781
        %v964 = vunpack.c.l.b16 %v782
        %v965 = vunpack.c.h.b16 %v782
        %v966 = vunpack.c.l.b16 %v783
        %v967 = vunpack.c.h.b16 %v783
        %v968 = vunpack.c.l.b16 %v784
        %v969 = vunpack.c.h.b16 %v784
        %v970 = vunpack.c.l.b16 %v785
        %v971 = vunpack.c.h.b16 %v785
        %v972 = vunpack.c.l.b16 %v786
        %v973 = vunpack.c.h.b16 %v786
        %v974 = vunpack.c.l.b16 %v787
        %v975 = vunpack.c.h.b16 %v787
        %v976 = vunpack.c.l.b16 %v788
        %v977 = vunpack.c.h.b16 %v788
        %v978 = vunpack.c.l.b16 %v789
        %v979 = vunpack.c.h.b16 %v789
        %v980 = vunpack.c.l.b16 %v790
        %v981 = vunpack.c.h.b16 %v790
        %v982 = vunpack.c.l.b16 %v791
        %v983 = vunpack.c.h.b16 %v791
        %v984 = vunpack.c.l.b16 %v792
        %v985 = vunpack.c.h.b16 %v792
        %v986 = vunpack.c.l.b16 %v793
        %v987 = vunpack.c.h.b16 %v793
        %v988 = vunpack.c.l.b16 %v794
        %v989 = vunpack.c.h.b16 %v794
        %v990 = vunpack.c.l.b16 %v795
        %v991 = vunpack.c.h.b16 %v795
        %v992 = vunpack.c.l.b16 %v796
        %v993 = vunpack.c.h.b16 %v796
        %v994 = vunpack.c.l.b16 %v797
        %v995 = vunpack.c.h.b16 %v797
        %v996 = vunpack.c.l.b16 %v798
        %v997 = vunpack.c.h.b16 %v798
        %v998 = vunpack.c.l.b16 %v799
        %v999 = vunpack.c.h.b16 %v799
        %v1000 = vpack.c.b16 %v880, %v872
        %v1001 = vpack.c.b16 %v881, %v873
        %v1002 = vpack.c.b16 %v882, %v874
        %v1003 = vpack.c.b16 %v883, %v875
        %v1004 = vpack.c.b16 %v884, %v876
        %v1005 = vpack.c.b16 %v885, %v877
        %v1006 = vpack.c.b16 %v886, %v878
        %v1007 = vpack.c.b16 %v887, %v879
        %v1008 = vpack.c.b16 %v896, %v888
        %v1009 = vpack.c.b16 %v897, %v889
        %v1010 = vpack.c.b16 %v898, %v890
        %v1011 = vpack.c.b16 %v899, %v891
        %v1012 = vpack.c.b16 %v900, %v892
        %v1013 = vpack.c.b16 %v901, %v893
        %v1014 = vpack.c.b16 %v902, %v894
        %v1015 = vpack.c.b16 %v903, %v895
        %v1016 = vpack.c.b16 %v912, %v904
        %v1017 = vpack.c.b16 %v913, %v905
        %v1018 = vpack.c.b16 %v914, %v906
        %v1019 = vpack.c.b16 %v915, %v907
        %v1020 = vpack.c.b16 %v916, %v908
        %v1021 = vpack.c.b16 %v917, %v909
        %v1022 = vpack.c.b16 %v918, %v910
        %v1023 = vpack.c.b16 %v919, %v911
        %v1024 = vpack.c.b16 %v928, %v920
        %v1025 = vpack.c.b16 %v929, %v921
        %v1026 = vpack.c.b16 %v930, %v922
        %v1027 = vpack.c.b16 %v931, %v923
        %v1028 = vpack.c.b16 %v932, %v924
        %v1029 = vpack.c.b16 %v933, %v925
        %v1030 = vpack.c.b16 %v934, %v926
        %v1031 = vpack.c.b16 %v935, %v927
        %v1032 = vpack.c.b16 %v944, %v936
        %v1033 = vpack.c.b16 %v945, %v937
        %v1034 = vpack.c.b16 %v946, %v938
        %v1035 = vpack.c.b16 %v947, %v939
        %v1036 = vpack.c.b16 %v948, %v940
        %v1037 = vpack.c.b16 %v949, %v941
        %v1038 = vpack.c.b16 %v950, %v942
        %v1039 = vpack.c.b16 %v951, %v943
        %v1040 = vpack.c.b16 %v960, %v952
        %v1041 = vpack.c.b16 %v961, %v953
        %v1042 = vpack.c.b16 %v962, %v954
        %v1043 = vpack.c.b16 %v963, %v955
        %v1044 = vpack.c.b16 %v964, %v956
        %v1045 = vpack.c.b16 %v965, %v957
        %v1046 = vpack.c.b16 %v966, %v958
        %v1047 = vpack.c.b16 %v967, %v959
        %v1048 = vpack.c.b16 %v976, %v968
        %v1049 = vpack.c.b16 %v977, %v969
        %v1050 = vpack.c.b16 %v978, %v970
        %v1051 = vpack.c.b16 %v979, %v971
        %v1052 = vpack.c.b16 %v980, %v972
        %v1053 = vpack.c.b16 %v981, %v973
        %v1054 = vpack.c.b16 %v982, %v974
        %v1055 = vpack.c.b16 %v983, %v975
        %v1056 = vpack.c.b16 %v992, %v984
        %v1057 = vpack.c.b16 %v993, %v985
        %v1058 = vpack.c.b16 %v994, %v986
        %v1059 = vpack.c.b16 %v995, %v987
        %v1060 = vpack.c.b16 %v996, %v988
        %v1061 = vpack.c.b16 %v997, %v989
        %v1062 = vpack.c.b16 %v998, %v990
        %v1063 = vpack.c.b16 %v999, %v991
        %1128 = vmatpush.bf16.msra.mxu0 %v1056
        %1129 = vmatpush.bf16.msra.mxu0 %v1048
        %1130 = vmatpush.bf16.msra.mxu0 %v1040
        %1131 = vmatpush.bf16.msra.mxu0 %v1032
        %1132 = vmatpush.bf16.msra.mxu0 %v1024
        %1133 = vmatpush.bf16.msra.mxu0 %v1016
        %1134 = vmatpush.bf16.msra.mxu0 %v1008
        %1135 = vmatpush.bf16.msra.mxu0 %v1000
        %1136 = vmatmul.bf16.gmra.mxu0 %v800
        %v1137 = vpop.f32.mrf.mxu0
        %v1138 = vadd.f32 0.0, %v1137
        %v1139 = vpop.f32.mrf.mxu0
        %v1140 = vadd.f32 0.0, %v1139
        %1141 = vmatmul.bf16.gmra.mxu0 %v801
        %v1142 = vpop.f32.mrf.mxu0
        %v1143 = vadd.f32 0.0, %v1142
        %v1144 = vpop.f32.mrf.mxu0
        %v1145 = vadd.f32 0.0, %v1144
        %1146 = vmatmul.bf16.gmra.mxu0 %v802
        %v1147 = vpop.f32.mrf.mxu0
        %v1148 = vadd.f32 0.0, %v1147
        %v1149 = vpop.f32.mrf.mxu0
        %v1150 = vadd.f32 0.0, %v1149
        %1151 = vmatmul.bf16.gmra.mxu0 %v803
        %v1152 = vpop.f32.mrf.mxu0
        %v1153 = vadd.f32 0.0, %v1152
        %v1154 = vpop.f32.mrf.mxu0
        %v1155 = vadd.f32 0.0, %v1154
        %1156 = vmatmul.bf16.gmra.mxu0 %v804
        %v1157 = vpop.f32.mrf.mxu0
        %v1158 = vadd.f32 0.0, %v1157
        %v1159 = vpop.f32.mrf.mxu0
        %v1160 = vadd.f32 0.0, %v1159
        %1161 = vmatmul.bf16.gmra.mxu0 %v805
        %v1162 = vpop.f32.mrf.mxu0
        %v1163 = vadd.f32 0.0, %v1162
        %v1164 = vpop.f32.mrf.mxu0
        %v1165 = vadd.f32 0.0, %v1164
        %1166 = vmatmul.bf16.gmra.mxu0 %v806
        %v1167 = vpop.f32.mrf.mxu0
        %v1168 = vadd.f32 0.0, %v1167
        %v1169 = vpop.f32.mrf.mxu0
        %v1170 = vadd.f32 0.0, %v1169
        %1171 = vmatmul.bf16.gmra.mxu0 %v807
        %v1172 = vpop.f32.mrf.mxu0
        %v1173 = vadd.f32 0.0, %v1172
        %v1174 = vpop.f32.mrf.mxu0
        %v1175 = vadd.f32 0.0, %v1174
        %1176 = vdwg.mxu0
        %1177 = vmatpush.bf16.msra.mxu0 %v1057
        %1178 = vmatpush.bf16.msra.mxu0 %v1049
        %1179 = vmatpush.bf16.msra.mxu0 %v1041
        %1180 = vmatpush.bf16.msra.mxu0 %v1033
        %1181 = vmatpush.bf16.msra.mxu0 %v1025
        %1182 = vmatpush.bf16.msra.mxu0 %v1017
        %1183 = vmatpush.bf16.msra.mxu0 %v1009
        %1184 = vmatpush.bf16.msra.mxu0 %v1001
        %1185 = vmatmul.bf16.gmra.mxu0 %v800
        %v1186 = vpop.f32.mrf.mxu0
        %v1187 = vadd.f32 0.0, %v1186
        %v1188 = vpop.f32.mrf.mxu0
        %v1189 = vadd.f32 0.0, %v1188
        %1190 = vmatmul.bf16.gmra.mxu0 %v801
        %v1191 = vpop.f32.mrf.mxu0
        %v1192 = vadd.f32 0.0, %v1191
        %v1193 = vpop.f32.mrf.mxu0
        %v1194 = vadd.f32 0.0, %v1193
        %1195 = vmatmul.bf16.gmra.mxu0 %v802
        %v1196 = vpop.f32.mrf.mxu0
        %v1197 = vadd.f32 0.0, %v1196
        %v1198 = vpop.f32.mrf.mxu0
        %v1199 = vadd.f32 0.0, %v1198
        %1200 = vmatmul.bf16.gmra.mxu0 %v803
        %v1201 = vpop.f32.mrf.mxu0
        %v1202 = vadd.f32 0.0, %v1201
        %v1203 = vpop.f32.mrf.mxu0
        %v1204 = vadd.f32 0.0, %v1203
        %1205 = vmatmul.bf16.gmra.mxu0 %v804
        %v1206 = vpop.f32.mrf.mxu0
        %v1207 = vadd.f32 0.0, %v1206
        %v1208 = vpop.f32.mrf.mxu0
        %v1209 = vadd.f32 0.0, %v1208
        %1210 = vmatmul.bf16.gmra.mxu0 %v805
        %v1211 = vpop.f32.mrf.mxu0
        %v1212 = vadd.f32 0.0, %v1211
        %v1213 = vpop.f32.mrf.mxu0
        %v1214 = vadd.f32 0.0, %v1213
        %1215 = vmatmul.bf16.gmra.mxu0 %v806
        %v1216 = vpop.f32.mrf.mxu0
        %v1217 = vadd.f32 0.0, %v1216
        %v1218 = vpop.f32.mrf.mxu0
        %v1219 = vadd.f32 0.0, %v1218
        %1220 = vmatmul.bf16.gmra.mxu0 %v807
        %v1221 = vpop.f32.mrf.mxu0
        %v1222 = vadd.f32 0.0, %v1221
        %v1223 = vpop.f32.mrf.mxu0
        %v1224 = vadd.f32 0.0, %v1223
        %1225 = vdwg.mxu0
        %1226 = vmatpush.bf16.msra.mxu0 %v1058
        %1227 = vmatpush.bf16.msra.mxu0 %v1050
        %1228 = vmatpush.bf16.msra.mxu0 %v1042
        %1229 = vmatpush.bf16.msra.mxu0 %v1034
        %1230 = vmatpush.bf16.msra.mxu0 %v1026
        %1231 = vmatpush.bf16.msra.mxu0 %v1018
        %1232 = vmatpush.bf16.msra.mxu0 %v1010
        %1233 = vmatpush.bf16.msra.mxu0 %v1002
        %1234 = vmatmul.bf16.gmra.mxu0 %v800
        %v1235 = vpop.f32.mrf.mxu0
        %v1236 = vadd.f32 0.0, %v1235
        %v1237 = vpop.f32.mrf.mxu0
        %v1238 = vadd.f32 0.0, %v1237
        %1239 = vmatmul.bf16.gmra.mxu0 %v801
        %v1240 = vpop.f32.mrf.mxu0
        %v1241 = vadd.f32 0.0, %v1240
        %v1242 = vpop.f32.mrf.mxu0
        %v1243 = vadd.f32 0.0, %v1242
        %1244 = vmatmul.bf16.gmra.mxu0 %v802
        %v1245 = vpop.f32.mrf.mxu0
        %v1246 = vadd.f32 0.0, %v1245
        %v1247 = vpop.f32.mrf.mxu0
        %v1248 = vadd.f32 0.0, %v1247
        %1249 = vmatmul.bf16.gmra.mxu0 %v803
        %v1250 = vpop.f32.mrf.mxu0
        %v1251 = vadd.f32 0.0, %v1250
        %v1252 = vpop.f32.mrf.mxu0
        %v1253 = vadd.f32 0.0, %v1252
        %1254 = vmatmul.bf16.gmra.mxu0 %v804
        %v1255 = vpop.f32.mrf.mxu0
        %v1256 = vadd.f32 0.0, %v1255
        %v1257 = vpop.f32.mrf.mxu0
        %v1258 = vadd.f32 0.0, %v1257
        %1259 = vmatmul.bf16.gmra.mxu0 %v805
        %v1260 = vpop.f32.mrf.mxu0
        %v1261 = vadd.f32 0.0, %v1260
        %v1262 = vpop.f32.mrf.mxu0
        %v1263 = vadd.f32 0.0, %v1262
        %1264 = vmatmul.bf16.gmra.mxu0 %v806
        %v1265 = vpop.f32.mrf.mxu0
        %v1266 = vadd.f32 0.0, %v1265
        %v1267 = vpop.f32.mrf.mxu0
        %v1268 = vadd.f32 0.0, %v1267
        %1269 = vmatmul.bf16.gmra.mxu0 %v807
        %v1270 = vpop.f32.mrf.mxu0
        %v1271 = vadd.f32 0.0, %v1270
        %v1272 = vpop.f32.mrf.mxu0
        %v1273 = vadd.f32 0.0, %v1272
        %1274 = vdwg.mxu0
        %1275 = vmatpush.bf16.msra.mxu0 %v1059
        %1276 = vmatpush.bf16.msra.mxu0 %v1051
        %1277 = vmatpush.bf16.msra.mxu0 %v1043
        %1278 = vmatpush.bf16.msra.mxu0 %v1035
        %1279 = vmatpush.bf16.msra.mxu0 %v1027
        %1280 = vmatpush.bf16.msra.mxu0 %v1019
        %1281 = vmatpush.bf16.msra.mxu0 %v1011
        %1282 = vmatpush.bf16.msra.mxu0 %v1003
        %1283 = vmatmul.bf16.gmra.mxu0 %v800
        %v1284 = vpop.f32.mrf.mxu0
        %v1285 = vadd.f32 0.0, %v1284
        %v1286 = vpop.f32.mrf.mxu0
        %v1287 = vadd.f32 0.0, %v1286
        %1288 = vmatmul.bf16.gmra.mxu0 %v801
        %v1289 = vpop.f32.mrf.mxu0
        %v1290 = vadd.f32 0.0, %v1289
        %v1291 = vpop.f32.mrf.mxu0
        %v1292 = vadd.f32 0.0, %v1291
        %1293 = vmatmul.bf16.gmra.mxu0 %v802
        %v1294 = vpop.f32.mrf.mxu0
        %v1295 = vadd.f32 0.0, %v1294
        %v1296 = vpop.f32.mrf.mxu0
        %v1297 = vadd.f32 0.0, %v1296
        %1298 = vmatmul.bf16.gmra.mxu0 %v803
        %v1299 = vpop.f32.mrf.mxu0
        %v1300 = vadd.f32 0.0, %v1299
        %v1301 = vpop.f32.mrf.mxu0
        %v1302 = vadd.f32 0.0, %v1301
        %1303 = vmatmul.bf16.gmra.mxu0 %v804
        %v1304 = vpop.f32.mrf.mxu0
        %v1305 = vadd.f32 0.0, %v1304
        %v1306 = vpop.f32.mrf.mxu0
        %v1307 = vadd.f32 0.0, %v1306
        %1308 = vmatmul.bf16.gmra.mxu0 %v805
        %v1309 = vpop.f32.mrf.mxu0
        %v1310 = vadd.f32 0.0, %v1309
        %v1311 = vpop.f32.mrf.mxu0
        %v1312 = vadd.f32 0.0, %v1311
        %1313 = vmatmul.bf16.gmra.mxu0 %v806
        %v1314 = vpop.f32.mrf.mxu0
        %v1315 = vadd.f32 0.0, %v1314
        %v1316 = vpop.f32.mrf.mxu0
        %v1317 = vadd.f32 0.0, %v1316
        %1318 = vmatmul.bf16.gmra.mxu0 %v807
        %v1319 = vpop.f32.mrf.mxu0
        %v1320 = vadd.f32 0.0, %v1319
        %v1321 = vpop.f32.mrf.mxu0
        %v1322 = vadd.f32 0.0, %v1321
        %1323 = vdwg.mxu0
        %1324 = vmatpush.bf16.msra.mxu0 %v1060
        %1325 = vmatpush.bf16.msra.mxu0 %v1052
        %1326 = vmatpush.bf16.msra.mxu0 %v1044
        %1327 = vmatpush.bf16.msra.mxu0 %v1036
        %1328 = vmatpush.bf16.msra.mxu0 %v1028
        %1329 = vmatpush.bf16.msra.mxu0 %v1020
        %1330 = vmatpush.bf16.msra.mxu0 %v1012
        %1331 = vmatpush.bf16.msra.mxu0 %v1004
        %1332 = vmatmul.bf16.gmra.mxu0 %v800
        %v1333 = vpop.f32.mrf.mxu0
        %v1334 = vadd.f32 0.0, %v1333
        %v1335 = vpop.f32.mrf.mxu0
        %v1336 = vadd.f32 0.0, %v1335
        %1337 = vmatmul.bf16.gmra.mxu0 %v801
        %v1338 = vpop.f32.mrf.mxu0
        %v1339 = vadd.f32 0.0, %v1338
        %v1340 = vpop.f32.mrf.mxu0
        %v1341 = vadd.f32 0.0, %v1340
        %1342 = vmatmul.bf16.gmra.mxu0 %v802
        %v1343 = vpop.f32.mrf.mxu0
        %v1344 = vadd.f32 0.0, %v1343
        %v1345 = vpop.f32.mrf.mxu0
        %v1346 = vadd.f32 0.0, %v1345
        %1347 = vmatmul.bf16.gmra.mxu0 %v803
        %v1348 = vpop.f32.mrf.mxu0
        %v1349 = vadd.f32 0.0, %v1348
        %v1350 = vpop.f32.mrf.mxu0
        %v1351 = vadd.f32 0.0, %v1350
        %1352 = vmatmul.bf16.gmra.mxu0 %v804
        %v1353 = vpop.f32.mrf.mxu0
        %v1354 = vadd.f32 0.0, %v1353
        %v1355 = vpop.f32.mrf.mxu0
        %v1356 = vadd.f32 0.0, %v1355
        %1357 = vmatmul.bf16.gmra.mxu0 %v805
        %v1358 = vpop.f32.mrf.mxu0
        %v1359 = vadd.f32 0.0, %v1358
        %v1360 = vpop.f32.mrf.mxu0
        %v1361 = vadd.f32 0.0, %v1360
        %1362 = vmatmul.bf16.gmra.mxu0 %v806
        %v1363 = vpop.f32.mrf.mxu0
        %v1364 = vadd.f32 0.0, %v1363
        %v1365 = vpop.f32.mrf.mxu0
        %v1366 = vadd.f32 0.0, %v1365
        %1367 = vmatmul.bf16.gmra.mxu0 %v807
        %v1368 = vpop.f32.mrf.mxu0
        %v1369 = vadd.f32 0.0, %v1368
        %v1370 = vpop.f32.mrf.mxu0
        %v1371 = vadd.f32 0.0, %v1370
        %1372 = vdwg.mxu0
        %1373 = vmatpush.bf16.msra.mxu0 %v1061
        %1374 = vmatpush.bf16.msra.mxu0 %v1053
        %1375 = vmatpush.bf16.msra.mxu0 %v1045
        %1376 = vmatpush.bf16.msra.mxu0 %v1037
        %1377 = vmatpush.bf16.msra.mxu0 %v1029
        %1378 = vmatpush.bf16.msra.mxu0 %v1021
        %1379 = vmatpush.bf16.msra.mxu0 %v1013
        %1380 = vmatpush.bf16.msra.mxu0 %v1005
        %1381 = vmatmul.bf16.gmra.mxu0 %v800
        %v1382 = vpop.f32.mrf.mxu0
        %v1383 = vadd.f32 0.0, %v1382
        %v1384 = vpop.f32.mrf.mxu0
        %v1385 = vadd.f32 0.0, %v1384
        %1386 = vmatmul.bf16.gmra.mxu0 %v801
        %v1387 = vpop.f32.mrf.mxu0
        %v1388 = vadd.f32 0.0, %v1387
        %v1389 = vpop.f32.mrf.mxu0
        %v1390 = vadd.f32 0.0, %v1389
        %1391 = vmatmul.bf16.gmra.mxu0 %v802
        %v1392 = vpop.f32.mrf.mxu0
        %v1393 = vadd.f32 0.0, %v1392
        %v1394 = vpop.f32.mrf.mxu0
        %v1395 = vadd.f32 0.0, %v1394
        %1396 = vmatmul.bf16.gmra.mxu0 %v803
        %v1397 = vpop.f32.mrf.mxu0
        %v1398 = vadd.f32 0.0, %v1397
        %v1399 = vpop.f32.mrf.mxu0
        %v1400 = vadd.f32 0.0, %v1399
        %1401 = vmatmul.bf16.gmra.mxu0 %v804
        %v1402 = vpop.f32.mrf.mxu0
        %v1403 = vadd.f32 0.0, %v1402
        %v1404 = vpop.f32.mrf.mxu0
        %v1405 = vadd.f32 0.0, %v1404
        %1406 = vmatmul.bf16.gmra.mxu0 %v805
        %v1407 = vpop.f32.mrf.mxu0
        %v1408 = vadd.f32 0.0, %v1407
        %v1409 = vpop.f32.mrf.mxu0
        %v1410 = vadd.f32 0.0, %v1409
        %1411 = vmatmul.bf16.gmra.mxu0 %v806
        %v1412 = vpop.f32.mrf.mxu0
        %v1413 = vadd.f32 0.0, %v1412
        %v1414 = vpop.f32.mrf.mxu0
        %v1415 = vadd.f32 0.0, %v1414
        %1416 = vmatmul.bf16.gmra.mxu0 %v807
        %v1417 = vpop.f32.mrf.mxu0
        %v1418 = vadd.f32 0.0, %v1417
        %v1419 = vpop.f32.mrf.mxu0
        %v1420 = vadd.f32 0.0, %v1419
        %1421 = vdwg.mxu0
        %1422 = vmatpush.bf16.msra.mxu0 %v1062
        %1423 = vmatpush.bf16.msra.mxu0 %v1054
        %1424 = vmatpush.bf16.msra.mxu0 %v1046
        %1425 = vmatpush.bf16.msra.mxu0 %v1038
        %1426 = vmatpush.bf16.msra.mxu0 %v1030
        %1427 = vmatpush.bf16.msra.mxu0 %v1022
        %1428 = vmatpush.bf16.msra.mxu0 %v1014
        %1429 = vmatpush.bf16.msra.mxu0 %v1006
        %1430 = vmatmul.bf16.gmra.mxu0 %v800
        %v1431 = vpop.f32.mrf.mxu0
        %v1432 = vadd.f32 0.0, %v1431
        %v1433 = vpop.f32.mrf.mxu0
        %v1434 = vadd.f32 0.0, %v1433
        %1435 = vmatmul.bf16.gmra.mxu0 %v801
        %v1436 = vpop.f32.mrf.mxu0
        %v1437 = vadd.f32 0.0, %v1436
        %v1438 = vpop.f32.mrf.mxu0
        %v1439 = vadd.f32 0.0, %v1438
        %1440 = vmatmul.bf16.gmra.mxu0 %v802
        %v1441 = vpop.f32.mrf.mxu0
        %v1442 = vadd.f32 0.0, %v1441
        %v1443 = vpop.f32.mrf.mxu0
        %v1444 = vadd.f32 0.0, %v1443
        %1445 = vmatmul.bf16.gmra.mxu0 %v803
        %v1446 = vpop.f32.mrf.mxu0
        %v1447 = vadd.f32 0.0, %v1446
        %v1448 = vpop.f32.mrf.mxu0
        %v1449 = vadd.f32 0.0, %v1448
        %1450 = vmatmul.bf16.gmra.mxu0 %v804
        %v1451 = vpop.f32.mrf.mxu0
        %v1452 = vadd.f32 0.0, %v1451
        %v1453 = vpop.f32.mrf.mxu0
        %v1454 = vadd.f32 0.0, %v1453
        %1455 = vmatmul.bf16.gmra.mxu0 %v805
        %v1456 = vpop.f32.mrf.mxu0
        %v1457 = vadd.f32 0.0, %v1456
        %v1458 = vpop.f32.mrf.mxu0
        %v1459 = vadd.f32 0.0, %v1458
        %1460 = vmatmul.bf16.gmra.mxu0 %v806
        %v1461 = vpop.f32.mrf.mxu0
        %v1462 = vadd.f32 0.0, %v1461
        %v1463 = vpop.f32.mrf.mxu0
        %v1464 = vadd.f32 0.0, %v1463
        %1465 = vmatmul.bf16.gmra.mxu0 %v807
        %v1466 = vpop.f32.mrf.mxu0
        %v1467 = vadd.f32 0.0, %v1466
        %v1468 = vpop.f32.mrf.mxu0
        %v1469 = vadd.f32 0.0, %v1468
        %1470 = vdwg.mxu0
        %1471 = vmatpush.bf16.msra.mxu0 %v1063
        %1472 = vmatpush.bf16.msra.mxu0 %v1055
        %1473 = vmatpush.bf16.msra.mxu0 %v1047
        %1474 = vmatpush.bf16.msra.mxu0 %v1039
        %1475 = vmatpush.bf16.msra.mxu0 %v1031
        %1476 = vmatpush.bf16.msra.mxu0 %v1023
        %1477 = vmatpush.bf16.msra.mxu0 %v1015
        %1478 = vmatpush.bf16.msra.mxu0 %v1007
        %1479 = vmatmul.bf16.gmra.mxu0 %v800
        %v1480 = vpop.f32.mrf.mxu0
        %v1481 = vadd.f32 0.0, %v1480
        %v1482 = vpop.f32.mrf.mxu0
        %v1483 = vadd.f32 0.0, %v1482
        %1484 = vmatmul.bf16.gmra.mxu0 %v801
        %v1485 = vpop.f32.mrf.mxu0
        %v1486 = vadd.f32 0.0, %v1485
        %v1487 = vpop.f32.mrf.mxu0
        %v1488 = vadd.f32 0.0, %v1487
        %1489 = vmatmul.bf16.gmra.mxu0 %v802
        %v1490 = vpop.f32.mrf.mxu0
        %v1491 = vadd.f32 0.0, %v1490
        %v1492 = vpop.f32.mrf.mxu0
        %v1493 = vadd.f32 0.0, %v1492
        %1494 = vmatmul.bf16.gmra.mxu0 %v803
        %v1495 = vpop.f32.mrf.mxu0
        %v1496 = vadd.f32 0.0, %v1495
        %v1497 = vpop.f32.mrf.mxu0
        %v1498 = vadd.f32 0.0, %v1497
        %1499 = vmatmul.bf16.gmra.mxu0 %v804
        %v1500 = vpop.f32.mrf.mxu0
        %v1501 = vadd.f32 0.0, %v1500
        %v1502 = vpop.f32.mrf.mxu0
        %v1503 = vadd.f32 0.0, %v1502
        %1504 = vmatmul.bf16.gmra.mxu0 %v805
        %v1505 = vpop.f32.mrf.mxu0
        %v1506 = vadd.f32 0.0, %v1505
        %v1507 = vpop.f32.mrf.mxu0
        %v1508 = vadd.f32 0.0, %v1507
        %1509 = vmatmul.bf16.gmra.mxu0 %v806
        %v1510 = vpop.f32.mrf.mxu0
        %v1511 = vadd.f32 0.0, %v1510
        %v1512 = vpop.f32.mrf.mxu0
        %v1513 = vadd.f32 0.0, %v1512
        %1514 = vmatmul.bf16.gmra.mxu0 %v807
        %v1515 = vpop.f32.mrf.mxu0
        %v1516 = vadd.f32 0.0, %v1515
        %v1517 = vpop.f32.mrf.mxu0
        %v1518 = vadd.f32 0.0, %v1517
        %1519 = vdwg.mxu0
        %v1520 = vld [vmem:[%s8] sm:$0xff]
        %v1522 = vperm.slane %v1520, 0
        %v1523 = vperm.slane %v1520, 1
        %v1524 = vperm.slane %v1520, 2
        %v1525 = vperm.slane %v1520, 3
        %v1526 = vperm.slane %v1520, 4
        %v1527 = vperm.slane %v1520, 5
        %v1528 = vperm.slane %v1520, 6
        %v1529 = vperm.slane %v1520, 7
        %v1538 = vmul.f32 %v1138, %v1522
        %v1539 = vmul.f32 %v1187, %v1523
        %v1540 = vmul.f32 %v1236, %v1524
        %v1541 = vmul.f32 %v1285, %v1525
        %v1542 = vmul.f32 %v1334, %v1526
        %v1543 = vmul.f32 %v1383, %v1527
        %v1544 = vmul.f32 %v1432, %v1528
        %v1545 = vmul.f32 %v1481, %v1529
        %v1546 = vmul.f32 %v1140, %v1522
        %v1547 = vmul.f32 %v1189, %v1523
        %v1548 = vmul.f32 %v1238, %v1524
        %v1549 = vmul.f32 %v1287, %v1525
        %v1550 = vmul.f32 %v1336, %v1526
        %v1551 = vmul.f32 %v1385, %v1527
        %v1552 = vmul.f32 %v1434, %v1528
        %v1553 = vmul.f32 %v1483, %v1529
        %v1554 = vmul.f32 %v1143, %v1522
        %v1555 = vmul.f32 %v1192, %v1523
        %v1556 = vmul.f32 %v1241, %v1524
        %v1557 = vmul.f32 %v1290, %v1525
        %v1558 = vmul.f32 %v1339, %v1526
        %v1559 = vmul.f32 %v1388, %v1527
        %v1560 = vmul.f32 %v1437, %v1528
        %v1561 = vmul.f32 %v1486, %v1529
        %v1562 = vmul.f32 %v1145, %v1522
        %v1563 = vmul.f32 %v1194, %v1523
        %v1564 = vmul.f32 %v1243, %v1524
        %v1565 = vmul.f32 %v1292, %v1525
        %v1566 = vmul.f32 %v1341, %v1526
        %v1567 = vmul.f32 %v1390, %v1527
        %v1568 = vmul.f32 %v1439, %v1528
        %v1569 = vmul.f32 %v1488, %v1529
        %v1570 = vmul.f32 %v1148, %v1522
        %v1571 = vmul.f32 %v1197, %v1523
        %v1572 = vmul.f32 %v1246, %v1524
        %v1573 = vmul.f32 %v1295, %v1525
        %v1574 = vmul.f32 %v1344, %v1526
        %v1575 = vmul.f32 %v1393, %v1527
        %v1576 = vmul.f32 %v1442, %v1528
        %v1577 = vmul.f32 %v1491, %v1529
        %v1578 = vmul.f32 %v1150, %v1522
        %v1579 = vmul.f32 %v1199, %v1523
        %v1580 = vmul.f32 %v1248, %v1524
        %v1581 = vmul.f32 %v1297, %v1525
        %v1582 = vmul.f32 %v1346, %v1526
        %v1583 = vmul.f32 %v1395, %v1527
        %v1584 = vmul.f32 %v1444, %v1528
        %v1585 = vmul.f32 %v1493, %v1529
        %v1586 = vmul.f32 %v1153, %v1522
        %v1587 = vmul.f32 %v1202, %v1523
        %v1588 = vmul.f32 %v1251, %v1524
        %v1589 = vmul.f32 %v1300, %v1525
        %v1590 = vmul.f32 %v1349, %v1526
        %v1591 = vmul.f32 %v1398, %v1527
        %v1592 = vmul.f32 %v1447, %v1528
        %v1593 = vmul.f32 %v1496, %v1529
        %v1594 = vmul.f32 %v1155, %v1522
        %v1595 = vmul.f32 %v1204, %v1523
        %v1596 = vmul.f32 %v1253, %v1524
        %v1597 = vmul.f32 %v1302, %v1525
        %v1598 = vmul.f32 %v1351, %v1526
        %v1599 = vmul.f32 %v1400, %v1527
        %v1600 = vmul.f32 %v1449, %v1528
        %v1601 = vmul.f32 %v1498, %v1529
        %v1602 = vmul.f32 %v1158, %v1522
        %v1603 = vmul.f32 %v1207, %v1523
        %v1604 = vmul.f32 %v1256, %v1524
        %v1605 = vmul.f32 %v1305, %v1525
        %v1606 = vmul.f32 %v1354, %v1526
        %v1607 = vmul.f32 %v1403, %v1527
        %v1608 = vmul.f32 %v1452, %v1528
        %v1609 = vmul.f32 %v1501, %v1529
        %v1610 = vmul.f32 %v1160, %v1522
        %v1611 = vmul.f32 %v1209, %v1523
        %v1612 = vmul.f32 %v1258, %v1524
        %v1613 = vmul.f32 %v1307, %v1525
        %v1614 = vmul.f32 %v1356, %v1526
        %v1615 = vmul.f32 %v1405, %v1527
        %v1616 = vmul.f32 %v1454, %v1528
        %v1617 = vmul.f32 %v1503, %v1529
        %v1618 = vmul.f32 %v1163, %v1522
        %v1619 = vmul.f32 %v1212, %v1523
        %v1620 = vmul.f32 %v1261, %v1524
        %v1621 = vmul.f32 %v1310, %v1525
        %v1622 = vmul.f32 %v1359, %v1526
        %v1623 = vmul.f32 %v1408, %v1527
        %v1624 = vmul.f32 %v1457, %v1528
        %v1625 = vmul.f32 %v1506, %v1529
        %v1626 = vmul.f32 %v1165, %v1522
        %v1627 = vmul.f32 %v1214, %v1523
        %v1628 = vmul.f32 %v1263, %v1524
        %v1629 = vmul.f32 %v1312, %v1525
        %v1630 = vmul.f32 %v1361, %v1526
        %v1631 = vmul.f32 %v1410, %v1527
        %v1632 = vmul.f32 %v1459, %v1528
        %v1633 = vmul.f32 %v1508, %v1529
        %v1634 = vmul.f32 %v1168, %v1522
        %v1635 = vmul.f32 %v1217, %v1523
        %v1636 = vmul.f32 %v1266, %v1524
        %v1637 = vmul.f32 %v1315, %v1525
        %v1638 = vmul.f32 %v1364, %v1526
        %v1639 = vmul.f32 %v1413, %v1527
        %v1640 = vmul.f32 %v1462, %v1528
        %v1641 = vmul.f32 %v1511, %v1529
        %v1642 = vmul.f32 %v1170, %v1522
        %v1643 = vmul.f32 %v1219, %v1523
        %v1644 = vmul.f32 %v1268, %v1524
        %v1645 = vmul.f32 %v1317, %v1525
        %v1646 = vmul.f32 %v1366, %v1526
        %v1647 = vmul.f32 %v1415, %v1527
        %v1648 = vmul.f32 %v1464, %v1528
        %v1649 = vmul.f32 %v1513, %v1529
        %v1650 = vmul.f32 %v1173, %v1522
        %v1651 = vmul.f32 %v1222, %v1523
        %v1652 = vmul.f32 %v1271, %v1524
        %v1653 = vmul.f32 %v1320, %v1525
        %v1654 = vmul.f32 %v1369, %v1526
        %v1655 = vmul.f32 %v1418, %v1527
        %v1656 = vmul.f32 %v1467, %v1528
        %v1657 = vmul.f32 %v1516, %v1529
        %v1658 = vmul.f32 %v1175, %v1522
        %v1659 = vmul.f32 %v1224, %v1523
        %v1660 = vmul.f32 %v1273, %v1524
        %v1661 = vmul.f32 %v1322, %v1525
        %v1662 = vmul.f32 %v1371, %v1526
        %v1663 = vmul.f32 %v1420, %v1527
        %v1664 = vmul.f32 %v1469, %v1528
        %v1665 = vmul.f32 %v1518, %v1529
        %v1666 = vld [vmem:[%s9] sm:$0xff]
        %v1668 = vperm.slane %v1666, 0
        %v1669 = vperm.slane %v1666, 1
        %v1670 = vperm.slane %v1666, 2
        %v1671 = vperm.slane %v1666, 3
        %v1672 = vperm.slane %v1666, 4
        %v1673 = vperm.slane %v1666, 5
        %v1674 = vperm.slane %v1666, 6
        %v1675 = vperm.slane %v1666, 7
        %v1684 = vadd.f32 %v1538, %v1668
        %v1685 = vadd.f32 %v1539, %v1669
        %v1686 = vadd.f32 %v1540, %v1670
        %v1687 = vadd.f32 %v1541, %v1671
        %v1688 = vadd.f32 %v1542, %v1672
        %v1689 = vadd.f32 %v1543, %v1673
        %v1690 = vadd.f32 %v1544, %v1674
        %v1691 = vadd.f32 %v1545, %v1675
        %v1692 = vadd.f32 %v1546, %v1668
        %v1693 = vadd.f32 %v1547, %v1669
        %v1694 = vadd.f32 %v1548, %v1670
        %v1695 = vadd.f32 %v1549, %v1671
        %v1696 = vadd.f32 %v1550, %v1672
        %v1697 = vadd.f32 %v1551, %v1673
        %v1698 = vadd.f32 %v1552, %v1674
        %v1699 = vadd.f32 %v1553, %v1675
        %v1700 = vadd.f32 %v1554, %v1668
        %v1701 = vadd.f32 %v1555, %v1669
        %v1702 = vadd.f32 %v1556, %v1670
        %v1703 = vadd.f32 %v1557, %v1671
        %v1704 = vadd.f32 %v1558, %v1672
        %v1705 = vadd.f32 %v1559, %v1673
        %v1706 = vadd.f32 %v1560, %v1674
        %v1707 = vadd.f32 %v1561, %v1675
        %v1708 = vadd.f32 %v1562, %v1668
        %v1709 = vadd.f32 %v1563, %v1669
        %v1710 = vadd.f32 %v1564, %v1670
        %v1711 = vadd.f32 %v1565, %v1671
        %v1712 = vadd.f32 %v1566, %v1672
        %v1713 = vadd.f32 %v1567, %v1673
        %v1714 = vadd.f32 %v1568, %v1674
        %v1715 = vadd.f32 %v1569, %v1675
        %v1716 = vadd.f32 %v1570, %v1668
        %v1717 = vadd.f32 %v1571, %v1669
        %v1718 = vadd.f32 %v1572, %v1670
        %v1719 = vadd.f32 %v1573, %v1671
        %v1720 = vadd.f32 %v1574, %v1672
        %v1721 = vadd.f32 %v1575, %v1673
        %v1722 = vadd.f32 %v1576, %v1674
        %v1723 = vadd.f32 %v1577, %v1675
        %v1724 = vadd.f32 %v1578, %v1668
        %v1725 = vadd.f32 %v1579, %v1669
        %v1726 = vadd.f32 %v1580, %v1670
        %v1727 = vadd.f32 %v1581, %v1671
        %v1728 = vadd.f32 %v1582, %v1672
        %v1729 = vadd.f32 %v1583, %v1673
        %v1730 = vadd.f32 %v1584, %v1674
        %v1731 = vadd.f32 %v1585, %v1675
        %v1732 = vadd.f32 %v1586, %v1668
        %v1733 = vadd.f32 %v1587, %v1669
        %v1734 = vadd.f32 %v1588, %v1670
        %v1735 = vadd.f32 %v1589, %v1671
        %v1736 = vadd.f32 %v1590, %v1672
        %v1737 = vadd.f32 %v1591, %v1673
        %v1738 = vadd.f32 %v1592, %v1674
        %v1739 = vadd.f32 %v1593, %v1675
        %v1740 = vadd.f32 %v1594, %v1668
        %v1741 = vadd.f32 %v1595, %v1669
        %v1742 = vadd.f32 %v1596, %v1670
        %v1743 = vadd.f32 %v1597, %v1671
        %v1744 = vadd.f32 %v1598, %v1672
        %v1745 = vadd.f32 %v1599, %v1673
        %v1746 = vadd.f32 %v1600, %v1674
        %v1747 = vadd.f32 %v1601, %v1675
        %v1748 = vadd.f32 %v1602, %v1668
        %v1749 = vadd.f32 %v1603, %v1669
        %v1750 = vadd.f32 %v1604, %v1670
        %v1751 = vadd.f32 %v1605, %v1671
        %v1752 = vadd.f32 %v1606, %v1672
        %v1753 = vadd.f32 %v1607, %v1673
        %v1754 = vadd.f32 %v1608, %v1674
        %v1755 = vadd.f32 %v1609, %v1675
        %v1756 = vadd.f32 %v1610, %v1668
        %v1757 = vadd.f32 %v1611, %v1669
        %v1758 = vadd.f32 %v1612, %v1670
        %v1759 = vadd.f32 %v1613, %v1671
        %v1760 = vadd.f32 %v1614, %v1672
        %v1761 = vadd.f32 %v1615, %v1673
        %v1762 = vadd.f32 %v1616, %v1674
        %v1763 = vadd.f32 %v1617, %v1675
        %v1764 = vadd.f32 %v1618, %v1668
        %v1765 = vadd.f32 %v1619, %v1669
        %v1766 = vadd.f32 %v1620, %v1670
        %v1767 = vadd.f32 %v1621, %v1671
        %v1768 = vadd.f32 %v1622, %v1672
        %v1769 = vadd.f32 %v1623, %v1673
        %v1770 = vadd.f32 %v1624, %v1674
        %v1771 = vadd.f32 %v1625, %v1675
        %v1772 = vadd.f32 %v1626, %v1668
        %v1773 = vadd.f32 %v1627, %v1669
        %v1774 = vadd.f32 %v1628, %v1670
        %v1775 = vadd.f32 %v1629, %v1671
        %v1776 = vadd.f32 %v1630, %v1672
        %v1777 = vadd.f32 %v1631, %v1673
        %v1778 = vadd.f32 %v1632, %v1674
        %v1779 = vadd.f32 %v1633, %v1675
        %v1780 = vadd.f32 %v1634, %v1668
        %v1781 = vadd.f32 %v1635, %v1669
        %v1782 = vadd.f32 %v1636, %v1670
        %v1783 = vadd.f32 %v1637, %v1671
        %v1784 = vadd.f32 %v1638, %v1672
        %v1785 = vadd.f32 %v1639, %v1673
        %v1786 = vadd.f32 %v1640, %v1674
        %v1787 = vadd.f32 %v1641, %v1675
        %v1788 = vadd.f32 %v1642, %v1668
        %v1789 = vadd.f32 %v1643, %v1669
        %v1790 = vadd.f32 %v1644, %v1670
        %v1791 = vadd.f32 %v1645, %v1671
        %v1792 = vadd.f32 %v1646, %v1672
        %v1793 = vadd.f32 %v1647, %v1673
        %v1794 = vadd.f32 %v1648, %v1674
        %v1795 = vadd.f32 %v1649, %v1675
        %v1796 = vadd.f32 %v1650, %v1668
        %v1797 = vadd.f32 %v1651, %v1669
        %v1798 = vadd.f32 %v1652, %v1670
        %v1799 = vadd.f32 %v1653, %v1671
        %v1800 = vadd.f32 %v1654, %v1672
        %v1801 = vadd.f32 %v1655, %v1673
        %v1802 = vadd.f32 %v1656, %v1674
        %v1803 = vadd.f32 %v1657, %v1675
        %v1804 = vadd.f32 %v1658, %v1668
        %v1805 = vadd.f32 %v1659, %v1669
        %v1806 = vadd.f32 %v1660, %v1670
        %v1807 = vadd.f32 %v1661, %v1671
        %v1808 = vadd.f32 %v1662, %v1672
        %v1809 = vadd.f32 %v1663, %v1673
        %v1810 = vadd.f32 %v1664, %v1674
        %v1811 = vadd.f32 %v1665, %v1675
        %v1812 = vmax.f32 %v1684, 0.0
        %v1813 = vmax.f32 %v1685, 0.0
        %v1814 = vmax.f32 %v1686, 0.0
        %v1815 = vmax.f32 %v1687, 0.0
        %v1816 = vmax.f32 %v1688, 0.0
        %v1817 = vmax.f32 %v1689, 0.0
        %v1818 = vmax.f32 %v1690, 0.0
        %v1819 = vmax.f32 %v1691, 0.0
        %v1820 = vmax.f32 %v1692, 0.0
        %v1821 = vmax.f32 %v1693, 0.0
        %v1822 = vmax.f32 %v1694, 0.0
        %v1823 = vmax.f32 %v1695, 0.0
        %v1824 = vmax.f32 %v1696, 0.0
        %v1825 = vmax.f32 %v1697, 0.0
        %v1826 = vmax.f32 %v1698, 0.0
        %v1827 = vmax.f32 %v1699, 0.0
        %v1828 = vmax.f32 %v1700, 0.0
        %v1829 = vmax.f32 %v1701, 0.0
        %v1830 = vmax.f32 %v1702, 0.0
        %v1831 = vmax.f32 %v1703, 0.0
        %v1832 = vmax.f32 %v1704, 0.0
        %v1833 = vmax.f32 %v1705, 0.0
        %v1834 = vmax.f32 %v1706, 0.0
        %v1835 = vmax.f32 %v1707, 0.0
        %v1836 = vmax.f32 %v1708, 0.0
        %v1837 = vmax.f32 %v1709, 0.0
        %v1838 = vmax.f32 %v1710, 0.0
        %v1839 = vmax.f32 %v1711, 0.0
        %v1840 = vmax.f32 %v1712, 0.0
        %v1841 = vmax.f32 %v1713, 0.0
        %v1842 = vmax.f32 %v1714, 0.0
        %v1843 = vmax.f32 %v1715, 0.0
        %v1844 = vmax.f32 %v1716, 0.0
        %v1845 = vmax.f32 %v1717, 0.0
        %v1846 = vmax.f32 %v1718, 0.0
        %v1847 = vmax.f32 %v1719, 0.0
        %v1848 = vmax.f32 %v1720, 0.0
        %v1849 = vmax.f32 %v1721, 0.0
        %v1850 = vmax.f32 %v1722, 0.0
        %v1851 = vmax.f32 %v1723, 0.0
        %v1852 = vmax.f32 %v1724, 0.0
        %v1853 = vmax.f32 %v1725, 0.0
        %v1854 = vmax.f32 %v1726, 0.0
        %v1855 = vmax.f32 %v1727, 0.0
        %v1856 = vmax.f32 %v1728, 0.0
        %v1857 = vmax.f32 %v1729, 0.0
        %v1858 = vmax.f32 %v1730, 0.0
        %v1859 = vmax.f32 %v1731, 0.0
        %v1860 = vmax.f32 %v1732, 0.0
        %v1861 = vmax.f32 %v1733, 0.0
        %v1862 = vmax.f32 %v1734, 0.0
        %v1863 = vmax.f32 %v1735, 0.0
        %v1864 = vmax.f32 %v1736, 0.0
        %v1865 = vmax.f32 %v1737, 0.0
        %v1866 = vmax.f32 %v1738, 0.0
        %v1867 = vmax.f32 %v1739, 0.0
        %v1868 = vmax.f32 %v1740, 0.0
        %v1869 = vmax.f32 %v1741, 0.0
        %v1870 = vmax.f32 %v1742, 0.0
        %v1871 = vmax.f32 %v1743, 0.0
        %v1872 = vmax.f32 %v1744, 0.0
        %v1873 = vmax.f32 %v1745, 0.0
        %v1874 = vmax.f32 %v1746, 0.0
        %v1875 = vmax.f32 %v1747, 0.0
        %v1876 = vmax.f32 %v1748, 0.0
        %v1877 = vmax.f32 %v1749, 0.0
        %v1878 = vmax.f32 %v1750, 0.0
        %v1879 = vmax.f32 %v1751, 0.0
        %v1880 = vmax.f32 %v1752, 0.0
        %v1881 = vmax.f32 %v1753, 0.0
        %v1882 = vmax.f32 %v1754, 0.0
        %v1883 = vmax.f32 %v1755, 0.0
        %v1884 = vmax.f32 %v1756, 0.0
        %v1885 = vmax.f32 %v1757, 0.0
        %v1886 = vmax.f32 %v1758, 0.0
        %v1887 = vmax.f32 %v1759, 0.0
        %v1888 = vmax.f32 %v1760, 0.0
        %v1889 = vmax.f32 %v1761, 0.0
        %v1890 = vmax.f32 %v1762, 0.0
        %v1891 = vmax.f32 %v1763, 0.0
        %v1892 = vmax.f32 %v1764, 0.0
        %v1893 = vmax.f32 %v1765, 0.0
        %v1894 = vmax.f32 %v1766, 0.0
        %v1895 = vmax.f32 %v1767, 0.0
        %v1896 = vmax.f32 %v1768, 0.0
        %v1897 = vmax.f32 %v1769, 0.0
        %v1898 = vmax.f32 %v1770, 0.0
        %v1899 = vmax.f32 %v1771, 0.0
        %v1900 = vmax.f32 %v1772, 0.0
        %v1901 = vmax.f32 %v1773, 0.0
        %v1902 = vmax.f32 %v1774, 0.0
        %v1903 = vmax.f32 %v1775, 0.0
        %v1904 = vmax.f32 %v1776, 0.0
        %v1905 = vmax.f32 %v1777, 0.0
        %v1906 = vmax.f32 %v1778, 0.0
        %v1907 = vmax.f32 %v1779, 0.0
        %v1908 = vmax.f32 %v1780, 0.0
        %v1909 = vmax.f32 %v1781, 0.0
        %v1910 = vmax.f32 %v1782, 0.0
        %v1911 = vmax.f32 %v1783, 0.0
        %v1912 = vmax.f32 %v1784, 0.0
        %v1913 = vmax.f32 %v1785, 0.0
        %v1914 = vmax.f32 %v1786, 0.0
        %v1915 = vmax.f32 %v1787, 0.0
        %v1916 = vmax.f32 %v1788, 0.0
        %v1917 = vmax.f32 %v1789, 0.0
        %v1918 = vmax.f32 %v1790, 0.0
        %v1919 = vmax.f32 %v1791, 0.0
        %v1920 = vmax.f32 %v1792, 0.0
        %v1921 = vmax.f32 %v1793, 0.0
        %v1922 = vmax.f32 %v1794, 0.0
        %v1923 = vmax.f32 %v1795, 0.0
        %v1924 = vmax.f32 %v1796, 0.0
        %v1925 = vmax.f32 %v1797, 0.0
        %v1926 = vmax.f32 %v1798, 0.0
        %v1927 = vmax.f32 %v1799, 0.0
        %v1928 = vmax.f32 %v1800, 0.0
        %v1929 = vmax.f32 %v1801, 0.0
        %v1930 = vmax.f32 %v1802, 0.0
        %v1931 = vmax.f32 %v1803, 0.0
        %v1932 = vmax.f32 %v1804, 0.0
        %v1933 = vmax.f32 %v1805, 0.0
        %v1934 = vmax.f32 %v1806, 0.0
        %v1935 = vmax.f32 %v1807, 0.0
        %v1936 = vmax.f32 %v1808, 0.0
        %v1937 = vmax.f32 %v1809, 0.0
        %v1938 = vmax.f32 %v1810, 0.0
        %v1939 = vmax.f32 %v1811, 0.0
        %v1940 = vmax.f32 %v1812, %v1820
        %v1941 = vmax.f32 %v1940, %v1828
        %v1942 = vmax.f32 %v1941, %v1836
        %v1943 = vmax.f32 %v1942, %v1844
        %v1944 = vmax.f32 %v1943, %v1852
        %v1945 = vmax.f32 %v1944, %v1860
        %v1946 = vmax.f32 %v1945, %v1868
        %v1947 = vmax.f32 %v1946, %v1876
        %v1948 = vmax.f32 %v1947, %v1884
        %v1949 = vmax.f32 %v1948, %v1892
        %v1950 = vmax.f32 %v1949, %v1900
        %v1951 = vmax.f32 %v1950, %v1908
        %v1952 = vmax.f32 %v1951, %v1916
        %v1953 = vmax.f32 %v1952, %v1924
        %v1954 = vmax.f32 %v1953, %v1932
        %v1955 = vrot.slane %v1954, 4
        %v1956 = vmax.f32 %v1954, %v1955
        %v1957 = vrot.slane %v1956, 2
        %v1958 = vmax.f32 %v1956, %v1957
        %v1959 = vrot.slane %v1958, 1
        %v1960 = vmax.f32 %v1958, %v1959
        %v1961 = vmax.f32 %v1813, %v1821
        %v1962 = vmax.f32 %v1961, %v1829
        %v1963 = vmax.f32 %v1962, %v1837
        %v1964 = vmax.f32 %v1963, %v1845
        %v1965 = vmax.f32 %v1964, %v1853
        %v1966 = vmax.f32 %v1965, %v1861
        %v1967 = vmax.f32 %v1966, %v1869
        %v1968 = vmax.f32 %v1967, %v1877
        %v1969 = vmax.f32 %v1968, %v1885
        %v1970 = vmax.f32 %v1969, %v1893
        %v1971 = vmax.f32 %v1970, %v1901
        %v1972 = vmax.f32 %v1971, %v1909
        %v1973 = vmax.f32 %v1972, %v1917
        %v1974 = vmax.f32 %v1973, %v1925
        %v1975 = vmax.f32 %v1974, %v1933
        %v1976 = vrot.slane %v1975, 4
        %v1977 = vmax.f32 %v1975, %v1976
        %v1978 = vrot.slane %v1977, 2
        %v1979 = vmax.f32 %v1977, %v1978
        %v1980 = vrot.slane %v1979, 1
        %v1981 = vmax.f32 %v1979, %v1980
        %v1982 = vmax.f32 %v1814, %v1822
        %v1983 = vmax.f32 %v1982, %v1830
        %v1984 = vmax.f32 %v1983, %v1838
        %v1985 = vmax.f32 %v1984, %v1846
        %v1986 = vmax.f32 %v1985, %v1854
        %v1987 = vmax.f32 %v1986, %v1862
        %v1988 = vmax.f32 %v1987, %v1870
        %v1989 = vmax.f32 %v1988, %v1878
        %v1990 = vmax.f32 %v1989, %v1886
        %v1991 = vmax.f32 %v1990, %v1894
        %v1992 = vmax.f32 %v1991, %v1902
        %v1993 = vmax.f32 %v1992, %v1910
        %v1994 = vmax.f32 %v1993, %v1918
        %v1995 = vmax.f32 %v1994, %v1926
        %v1996 = vmax.f32 %v1995, %v1934
        %v1997 = vrot.slane %v1996, 4
        %v1998 = vmax.f32 %v1996, %v1997
        %v1999 = vrot.slane %v1998, 2
        %v2000 = vmax.f32 %v1998, %v1999
        %v2001 = vrot.slane %v2000, 1
        %v2002 = vmax.f32 %v2000, %v2001
        %v2003 = vmax.f32 %v1815, %v1823
        %v2004 = vmax.f32 %v2003, %v1831
        %v2005 = vmax.f32 %v2004, %v1839
        %v2006 = vmax.f32 %v2005, %v1847
        %v2007 = vmax.f32 %v2006, %v1855
        %v2008 = vmax.f32 %v2007, %v1863
        %v2009 = vmax.f32 %v2008, %v1871
        %v2010 = vmax.f32 %v2009, %v1879
        %v2011 = vmax.f32 %v2010, %v1887
        %v2012 = vmax.f32 %v2011, %v1895
        %v2013 = vmax.f32 %v2012, %v1903
        %v2014 = vmax.f32 %v2013, %v1911
        %v2015 = vmax.f32 %v2014, %v1919
        %v2016 = vmax.f32 %v2015, %v1927
        %v2017 = vmax.f32 %v2016, %v1935
        %v2018 = vrot.slane %v2017, 4
        %v2019 = vmax.f32 %v2017, %v2018
        %v2020 = vrot.slane %v2019, 2
        %v2021 = vmax.f32 %v2019, %v2020
        %v2022 = vrot.slane %v2021, 1
        %v2023 = vmax.f32 %v2021, %v2022
        %v2024 = vmax.f32 %v1816, %v1824
        %v2025 = vmax.f32 %v2024, %v1832
        %v2026 = vmax.f32 %v2025, %v1840
        %v2027 = vmax.f32 %v2026, %v1848
        %v2028 = vmax.f32 %v2027, %v1856
        %v2029 = vmax.f32 %v2028, %v1864
        %v2030 = vmax.f32 %v2029, %v1872
        %v2031 = vmax.f32 %v2030, %v1880
        %v2032 = vmax.f32 %v2031, %v1888
        %v2033 = vmax.f32 %v2032, %v1896
        %v2034 = vmax.f32 %v2033, %v1904
        %v2035 = vmax.f32 %v2034, %v1912
        %v2036 = vmax.f32 %v2035, %v1920
        %v2037 = vmax.f32 %v2036, %v1928
        %v2038 = vmax.f32 %v2037, %v1936
        %v2039 = vrot.slane %v2038, 4
        %v2040 = vmax.f32 %v2038, %v2039
        %v2041 = vrot.slane %v2040, 2
        %v2042 = vmax.f32 %v2040, %v2041
        %v2043 = vrot.slane %v2042, 1
        %v2044 = vmax.f32 %v2042, %v2043
        %v2045 = vmax.f32 %v1817, %v1825
        %v2046 = vmax.f32 %v2045, %v1833
        %v2047 = vmax.f32 %v2046, %v1841
        %v2048 = vmax.f32 %v2047, %v1849
        %v2049 = vmax.f32 %v2048, %v1857
        %v2050 = vmax.f32 %v2049, %v1865
        %v2051 = vmax.f32 %v2050, %v1873
        %v2052 = vmax.f32 %v2051, %v1881
        %v2053 = vmax.f32 %v2052, %v1889
        %v2054 = vmax.f32 %v2053, %v1897
        %v2055 = vmax.f32 %v2054, %v1905
        %v2056 = vmax.f32 %v2055, %v1913
        %v2057 = vmax.f32 %v2056, %v1921
        %v2058 = vmax.f32 %v2057, %v1929
        %v2059 = vmax.f32 %v2058, %v1937
        %v2060 = vrot.slane %v2059, 4
        %v2061 = vmax.f32 %v2059, %v2060
        %v2062 = vrot.slane %v2061, 2
        %v2063 = vmax.f32 %v2061, %v2062
        %v2064 = vrot.slane %v2063, 1
        %v2065 = vmax.f32 %v2063, %v2064
        %v2066 = vmax.f32 %v1818, %v1826
        %v2067 = vmax.f32 %v2066, %v1834
        %v2068 = vmax.f32 %v2067, %v1842
        %v2069 = vmax.f32 %v2068, %v1850
        %v2070 = vmax.f32 %v2069, %v1858
        %v2071 = vmax.f32 %v2070, %v1866
        %v2072 = vmax.f32 %v2071, %v1874
        %v2073 = vmax.f32 %v2072, %v1882
        %v2074 = vmax.f32 %v2073, %v1890
        %v2075 = vmax.f32 %v2074, %v1898
        %v2076 = vmax.f32 %v2075, %v1906
        %v2077 = vmax.f32 %v2076, %v1914
        %v2078 = vmax.f32 %v2077, %v1922
        %v2079 = vmax.f32 %v2078, %v1930
        %v2080 = vmax.f32 %v2079, %v1938
        %v2081 = vrot.slane %v2080, 4
        %v2082 = vmax.f32 %v2080, %v2081
        %v2083 = vrot.slane %v2082, 2
        %v2084 = vmax.f32 %v2082, %v2083
        %v2085 = vrot.slane %v2084, 1
        %v2086 = vmax.f32 %v2084, %v2085
        %v2087 = vmax.f32 %v1819, %v1827
        %v2088 = vmax.f32 %v2087, %v1835
        %v2089 = vmax.f32 %v2088, %v1843
        %v2090 = vmax.f32 %v2089, %v1851
        %v2091 = vmax.f32 %v2090, %v1859
        %v2092 = vmax.f32 %v2091, %v1867
        %v2093 = vmax.f32 %v2092, %v1875
        %v2094 = vmax.f32 %v2093, %v1883
        %v2095 = vmax.f32 %v2094, %v1891
        %v2096 = vmax.f32 %v2095, %v1899
        %v2097 = vmax.f32 %v2096, %v1907
        %v2098 = vmax.f32 %v2097, %v1915
        %v2099 = vmax.f32 %v2098, %v1923
        %v2100 = vmax.f32 %v2099, %v1931
        %v2101 = vmax.f32 %v2100, %v1939
        %v2102 = vrot.slane %v2101, 4
        %v2103 = vmax.f32 %v2101, %v2102
        %v2104 = vrot.slane %v2103, 2
        %v2105 = vmax.f32 %v2103, %v2104
        %v2106 = vrot.slane %v2105, 1
        %v2107 = vmax.f32 %v2105, %v2106
        %p2108 = scmp.eq.s32.totalorder %s30, 0
        // Predicated region
        $region65: #{tpu_custom_call.1} parent=59 // pred_check
          %p2109 = pneg %p2108
        $region66: #{tpu_custom_call.1} parent=59 // pred_check_branch
          %2111 = sbr.rel (%p2109) target = $region68
        $region67: #{tpu_custom_call.1} parent=59 // pred_region
          %v2120 = vrot.slane %v1981, 7
          %v2121 = vrot.slane %v2002, 6
          %v2122 = vrot.slane %v2023, 5
          %v2123 = vrot.slane %v2044, 4
          %v2124 = vrot.slane %v2065, 3
          %v2125 = vrot.slane %v2086, 2
          %v2126 = vrot.slane %v2107, 1
          %v2127 = vsel %vm454, %v1960, %v2120
          %vm2128 = vcmask 1042434
          %v2129 = vsel %vm2128, %v2121, %v2122
          %v2130 = vsel %vm455, %v2127, %v2129
          %vm2131 = vcmask 1044484
          %v2132 = vsel %vm2131, %v2123, %v2124
          %vm2133 = vcmask 1046534
          %v2134 = vsel %vm2133, %v2125, %v2126
          %vm2135 = vcmask 1045508
          %v2136 = vsel %vm2135, %v2132, %v2134
          %vm2137 = vcmask 1043456
          %v2138 = vsel %vm2137, %v2130, %v2136
          %2140 = vst [vmem:[%s392] sm:$0xff] %v2138
        $region68: #{tpu_custom_call.1} parent=59 // pred_fallthru
          _
        %p2141 = scmp.gt.s32.totalorder %s30, 0
        // Predicated region
        $region69: #{tpu_custom_call.1} parent=59 // pred_check
          %p2142 = pneg %p2141
        $region70: #{tpu_custom_call.1} parent=59 // pred_check_branch
          %2144 = sbr.rel (%p2142) target = $region72
        $region71: #{tpu_custom_call.1} parent=59 // pred_region
          %v2145 = vld [vmem:[%s392] sm:$0xff]
          %v2154 = vrot.slane %v1981, 7
          %v2155 = vrot.slane %v2002, 6
          %v2156 = vrot.slane %v2023, 5
          %v2157 = vrot.slane %v2044, 4
          %v2158 = vrot.slane %v2065, 3
          %v2159 = vrot.slane %v2086, 2
          %v2160 = vrot.slane %v2107, 1
          %v2161 = vsel %vm454, %v1960, %v2154
          %vm2162 = vcmask 1042434
          %v2163 = vsel %vm2162, %v2155, %v2156
          %v2164 = vsel %vm455, %v2161, %v2163
          %vm2165 = vcmask 1044484
          %v2166 = vsel %vm2165, %v2157, %v2158
          %vm2167 = vcmask 1046534
          %v2168 = vsel %vm2167, %v2159, %v2160
          %vm2169 = vcmask 1045508
          %v2170 = vsel %vm2169, %v2166, %v2168
          %vm2171 = vcmask 1043456
          %v2172 = vsel %vm2171, %v2164, %v2170
          %v2174 = vmax.f32 %v2145, %v2172
          %2175 = vst [vmem:[%s392] sm:$0xff] %v2174
        $region72: #{tpu_custom_call.1} parent=59 // pred_fallthru
          _
        %s2176 = sand.u32 %s262, 1
        %s2177 = scalar_lea.sflag [#allocation4], %s2176
        %s2178 = sand.u32 %s262, 1
        %s2179 = smul.addr %s2178, 8
        %s2180 = scalar_lea.vmem [#allocation5], %s2179
        // Predicated region
        $region73: #{tpu_custom_call.1} parent=59 // pred_check
          %p2181 = pneg %p272
        $region74: #{tpu_custom_call.1} parent=59 // pred_check_branch
          %2183 = sbr.rel (%p2181) target = $region76
        $region75: #{tpu_custom_call.1} parent=59 // pred_region
          %2185 = vsyncadd %s2177, 0
          %s2186 = smul.addr %s29, 8
          %s2187 = scalar_lea.hbm %s10, %s2186
          %s2189 = sshll.u32 %s2180, 4
          %s2190 = int_to_ptr.vmem [resolvable:$true] %s2189
          %s2191 = sshll.u32 %s2187, 4
          %s2192 = int_to_ptr.hbm [resolvable:$true] %s2191
          %2194 = dma.vmem_to_hbm [thread:$0]  %s2190, 128, %s2192, %s2177
        $region76: #{tpu_custom_call.1} parent=59 // pred_fallthru
          _
      $region60: #{tpu_custom_call.1} parent=5 // pred_fallthru
        _
      %p2195 = scmp.le.s32.totalorder 2, %s20
      // Predicated region
      $region77: #{tpu_custom_call.1} parent=5 // pred_check
        %p2196 = pneg %p2195
      $region78: #{tpu_custom_call.1} parent=5 // pred_check_branch
        %2198 = sbr.rel (%p2196) target = $region80
      $region79: #{tpu_custom_call.1} parent=5 // pred_region
        %s2199 = ssub.s32 %s20, 2
        // Predicated region
        $region81: #{tpu_custom_call.1} parent=79 // pred_check
          %p2200 = pneg %p278
        $region82: #{tpu_custom_call.1} parent=79 // pred_check_branch
          %2202 = sbr.rel (%p2200) target = $region84
        $region83: #{tpu_custom_call.1} parent=79 // pred_region
          %s2203 = sand.u32 %s263, 1
          %s2204 = scalar_lea.sflag [#allocation4], %s2203
          %s2205 = sand.u32 %s263, 1
          %s2206 = smul.addr %s2205, 8
          %s2207 = scalar_lea.vmem [#allocation5], %s2206
          %2209 = dma.done %s2204, 128
        $region84: #{tpu_custom_call.1} parent=79 // pred_fallthru
          _
      $region80: #{tpu_custom_call.1} parent=5 // pred_fallthru
        _
    $region6: #{tpu_custom_call.1} parent=1 // loop_footer
      %s24 = sadd.s32 1, %s20
    $region7: #{tpu_custom_call.1} parent=1 // loop_footer_branch
      %19 = sbr.rel target = $region3
    $region8: #{tpu_custom_call.1} parent=1 // loop_exit
      _
    %2210 = vsyncpa [#allocation3], 1
    %s2211 = scalar_lea.sflag [#allocation3], 1
    %2212 = vsyncpa %s2211, 1
    %2213 = vsyncpa [#allocation4], 1
    %s2214 = scalar_lea.sflag [#allocation4], 1
    %2215 = vsyncpa %s2214, 1

</llo_original>
